<compile_context>
chip_gen: v7x
topology: tpu7x:2x2x1
jax: 0.10.0
libtpu: 0.0.40
codegen_flags: <defaults>
</compile_context>

<pallas_src>
import jax
import jax.numpy as jnp
from jax.experimental import pallas as pl
from jax.experimental.pallas import tpu as pltpu  # noqa: F401  (TPU backend)


# ----------------------------------------------------------------------------
# In-kernel helpers
# ----------------------------------------------------------------------------
def _layernorm(h, gamma, beta, eps=1e-5):
    # PyTorch nn.LayerNorm default eps = 1e-5
    mu = jnp.mean(h, axis=-1, keepdims=True)
    var = jnp.mean((h - mu) ** 2, axis=-1, keepdims=True)
    return (h - mu) * jax.lax.rsqrt(var + eps) * gamma + beta


# ----------------------------------------------------------------------------
# Single fused kernel: 3 projection branches + hs_org + FC decoder
# ----------------------------------------------------------------------------
def predictor_kernel(x_ref, z_ref, s_ref,
                     w1_ref, b1_ref, g1_ref, be1_ref,
                     w2_ref, b2_ref, g2_ref, be2_ref,
                     hsg_ref, hsb_ref,
                     dw1_ref, db1_ref, dw3_ref, db3_ref,
                     hs_ref, out_ref):
    srcs = (x_ref[...], z_ref[...], s_ref[...])

    # --- three projection branches (static unrolled loop, params stacked) ---
    modes = []
    for k in range(3):
        h = jnp.dot(srcs[k], w1_ref[k],
                    preferred_element_type=jnp.float32) + b1_ref[k]
        h = _layernorm(h, g1_ref[k], be1_ref[k])
        h = jnp.maximum(h, 0.0)          # activation (ReLU); dropout = identity
        h = jnp.dot(h, w2_ref[k],
                    preferred_element_type=jnp.float32) + b2_ref[k]
        h = _layernorm(h, g2_ref[k], be2_ref[k])
        h = jnp.maximum(h, 0.0)
        modes.append(h)
    px, pz, ps = modes                   # each (B, D)

    # --- hs_org = LayerNorm(sum over the three modes) ---
    hs_org = _layernorm(px + pz + ps, hsg_ref[...], hsb_ref[...])

    # --- lane-dense hs slab (B, 4*D); order matches permute(1,0,2)+flatten ---
    hs_flat = jnp.concatenate([px, pz, ps, hs_org], axis=-1)
    hs_ref[...] = hs_flat

    # --- FC_Decoder: Linear -> Sigmoid -> (dropout=id) -> Linear ---
    d = jnp.dot(hs_flat, dw1_ref[...],
                preferred_element_type=jnp.float32) + db1_ref[...]
    d = jax.nn.sigmoid(d)
    out_ref[...] = jnp.dot(d, dw3_ref[...],
                           preferred_element_type=jnp.float32) + db3_ref[...]


# ----------------------------------------------------------------------------
# Parameter construction (deterministic, synthetic; branch params stacked)
# ----------------------------------------------------------------------------
def make_params(key, d_in, D, num_class, input_num_total):
    H = 2 * D                       # hidden width of each projection branch
    d_dec = D // input_num_total    # decoder hidden width (dim_feedforward // input_num)
    ks = jax.random.split(key, 8)

    def w(k, shape):
        return jax.random.normal(k, shape, jnp.float32) * 0.05

    return {
        # stacked branch params: index 0 = ppi x-mode, 1 = ppi z-mode, 2 = seq
        "w1": jnp.stack([w(ks[0], (d_in, H)), w(ks[1], (d_in, H)),
                         w(ks[2], (d_in, H))], axis=0),
        "b1": jnp.zeros((3, 1, H), jnp.float32),
        "g1": jnp.ones((3, 1, H), jnp.float32),
        "be1": jnp.zeros((3, 1, H), jnp.float32),
        "w2": jnp.stack([w(ks[3], (H, D)), w(ks[4], (H, D)),
                         w(ks[5], (H, D))], axis=0),
        "b2": jnp.zeros((3, 1, D), jnp.float32),
        "g2": jnp.ones((3, 1, D), jnp.float32),
        "be2": jnp.zeros((3, 1, D), jnp.float32),
        # hs_org LayerNorm
        "hs_g": jnp.ones((1, D), jnp.float32),
        "hs_b": jnp.zeros((1, D), jnp.float32),
        # FC_Decoder (input_num = input_num_total = 4)
        "dw1": w(ks[6], (D * input_num_total, d_dec)),
        "db1": jnp.zeros((1, d_dec), jnp.float32),
        "dw3": w(ks[7], (d_dec, num_class)),
        "db3": jnp.zeros((1, num_class), jnp.float32),
    }


# ----------------------------------------------------------------------------
# Predictor forward (one pallas_call; whole problem fits trivially in VMEM)
# ----------------------------------------------------------------------------
@jax.jit
def predictor_forward(src_x, src_z, src_s, params):
    B, d_in = src_x.shape
    H = params["w1"].shape[-1]
    D = params["w2"].shape[-1]
    d_dec = params["dw1"].shape[-1]
    C = params["dw3"].shape[-1]
    n_modes = 4

    # advisory cost estimate (kernel is launch/latency bound; helps the
    # XLA scheduler around the custom call)
    flops = 2 * B * (3 * d_in * H + 3 * H * D + n_modes * D * d_dec + d_dec * C)
    transcendentals = B * (3 * H + 3 * D + D) + B * d_dec   # rsqrt + sigmoid
    arrs = [src_x, src_z, src_s] + [params[k] for k in params]
    bytes_accessed = (sum(int(a.size) * a.dtype.itemsize for a in arrs)
                      + (B * n_modes * D + B * C) * 4)

    hs_flat, out = pl.pallas_call(
        predictor_kernel,
        out_shape=(jax.ShapeDtypeStruct((B, n_modes * D), jnp.float32),
                   jax.ShapeDtypeStruct((B, C), jnp.float32)),
        cost_estimate=pl.CostEstimate(flops=flops,
                                      transcendentals=transcendentals,
                                      bytes_accessed=bytes_accessed),
    )(src_x, src_z, src_s,
      params["w1"], params["b1"], params["g1"], params["be1"],
      params["w2"], params["b2"], params["g2"], params["be2"],
      params["hs_g"], params["hs_b"],
      params["dw1"], params["db1"], params["dw3"], params["db3"])

    # layout plumbing only: (B, 4*D) lane-dense slab -> (4, B, D) module output
    hs = jnp.transpose(hs_flat.reshape(B, n_modes, D), (1, 0, 2))
    return hs, out


# ----------------------------------------------------------------------------
# Pure-JAX reference (same math) for a correctness check
# ----------------------------------------------------------------------------
def reference_forward(src_x, src_z, src_s, p):
    def ln(h, g, b, eps=1e-5):
        mu = h.mean(-1, keepdims=True)
        var = ((h - mu) ** 2).mean(-1, keepdims=True)
        return (h - mu) / jnp.sqrt(var + eps) * g + b

    def branch(x, k):
        h = x @ p["w1"][k] + p["b1"][k]
        h = jnp.maximum(ln(h, p["g1"][k], p["be1"][k]), 0.0)
        h = h @ p["w2"][k] + p["b2"][k]
        h = jnp.maximum(ln(h, p["g2"][k], p["be2"][k]), 0.0)
        return h

    px, pz, ps = branch(src_x, 0), branch(src_z, 1), branch(src_s, 2)
    hs_org = ln(px + pz + ps, p["hs_g"], p["hs_b"])
    hs = jnp.stack([px, pz, ps, hs_org], axis=0)          # (4, B, D)
    B = src_x.shape[0]
    hs_flat = jnp.transpose(hs, (1, 0, 2)).reshape(B, -1)
    d = jax.nn.sigmoid(hs_flat @ p["dw1"] + p["db1"])
    out = d @ p["dw3"] + p["db3"]
    return hs, out


# ----------------------------------------------------------------------------
# Main
# ----------------------------------------------------------------------------
if __name__ == "__main__":
    B = 8                # batch (one full sublane group)
    d_in = 64            # raw feature dim of each modality
    D = 32               # dim_feedforward
    num_class = 16
    input_num_total = 4  # input_num(=3) + 1, as in Predictor.__init__

    key = jax.random.PRNGKey(0)
    kp, k1, k2, k3 = jax.random.split(key, 4)

    params = make_params(kp, d_in, D, num_class, input_num_total)
    src_x = jax.random.normal(k1, (B, d_in), jnp.float32)
    src_z = jax.random.normal(k2, (B, d_in), jnp.float32)
    src_s = jax.random.normal(k3, (B, d_in), jnp.float32)

    hs, out = predictor_forward(src_x, src_z, src_s, params)
    jax.block_until_ready((hs, out))

    assert hs.shape == (4, B, D), hs.shape
    assert out.shape == (B, num_class), out.shape

    hs_ref, out_ref = reference_forward(src_x, src_z, src_s, params)
    assert jnp.allclose(hs, hs_ref, atol=2e-3, rtol=2e-3)
    assert jnp.allclose(out, out_ref, atol=2e-3, rtol=2e-3)

    print("KERNEL_OK")
</pallas_src>

<mosaic_0001>
module attributes {stable_mosaic.version = 11 : i64} {
  func.func @predictor_kernel(%arg0: memref<8x64xf32, #tpu.memory_space<vmem>>, %arg1: memref<8x64xf32, #tpu.memory_space<vmem>>, %arg2: memref<8x64xf32, #tpu.memory_space<vmem>>, %arg3: memref<3x64x64xf32, #tpu.memory_space<vmem>>, %arg4: memref<3x1x64xf32, #tpu.memory_space<vmem>>, %arg5: memref<3x1x64xf32, #tpu.memory_space<vmem>>, %arg6: memref<3x1x64xf32, #tpu.memory_space<vmem>>, %arg7: memref<3x64x32xf32, #tpu.memory_space<vmem>>, %arg8: memref<3x1x32xf32, #tpu.memory_space<vmem>>, %arg9: memref<3x1x32xf32, #tpu.memory_space<vmem>>, %arg10: memref<3x1x32xf32, #tpu.memory_space<vmem>>, %arg11: memref<1x32xf32, #tpu.memory_space<vmem>>, %arg12: memref<1x32xf32, #tpu.memory_space<vmem>>, %arg13: memref<128x8xf32, #tpu.memory_space<vmem>>, %arg14: memref<1x8xf32, #tpu.memory_space<vmem>>, %arg15: memref<8x16xf32, #tpu.memory_space<vmem>>, %arg16: memref<1x16xf32, #tpu.memory_space<vmem>>, %arg17: memref<8x128xf32, #tpu.memory_space<vmem>>, %arg18: memref<8x16xf32, #tpu.memory_space<vmem>>) attributes {dimension_semantics = [], scalar_prefetch = 0 : i64, scratch_operands = 0 : i64, tpu.core_type = #tpu.core_type<tc>} {
    %c0 = arith.constant 0 : index
    %c0_0 = arith.constant 0 : index
    %0 = vector.load %arg0[%c0, %c0_0] : memref<8x64xf32, #tpu.memory_space<vmem>>, vector<8x64xf32>
    %c0_1 = arith.constant 0 : index
    %c0_2 = arith.constant 0 : index
    %1 = vector.load %arg1[%c0_1, %c0_2] : memref<8x64xf32, #tpu.memory_space<vmem>>, vector<8x64xf32>
    %c0_3 = arith.constant 0 : index
    %c0_4 = arith.constant 0 : index
    %2 = vector.load %arg2[%c0_3, %c0_4] : memref<8x64xf32, #tpu.memory_space<vmem>>, vector<8x64xf32>
    %c0_5 = arith.constant 0 : index
    %c0_6 = arith.constant 0 : index
    %c0_7 = arith.constant 0 : index
    %3 = vector.load %arg3[%c0_5, %c0_6, %c0_7] : memref<3x64x64xf32, #tpu.memory_space<vmem>>, vector<1x64x64xf32>
    %4 = vector.shape_cast %3 : vector<1x64x64xf32> to vector<64x64xf32>
    %cst = arith.constant dense<0.000000e+00> : vector<8x64xf32>
    %5 = tpu.matmul %0, %4, %cst {dimension_numbers = #tpu.dot_dimension_numbers<[1], [0], [0], [1], [0, 0, 1, 1], [], []>} : vector<8x64xf32>, vector<64x64xf32>, vector<8x64xf32> -> vector<8x64xf32>
    %c0_8 = arith.constant 0 : index
    %c0_9 = arith.constant 0 : index
    %c0_10 = arith.constant 0 : index
    %6 = vector.load %arg4[%c0_8, %c0_9, %c0_10] : memref<3x1x64xf32, #tpu.memory_space<vmem>>, vector<1x1x64xf32>
    %7 = vector.shape_cast %6 : vector<1x1x64xf32> to vector<1x64xf32>
    %8 = vector.broadcast %7 : vector<1x64xf32> to vector<8x64xf32>
    %9 = arith.addf %5, %8 : vector<8x64xf32>
    %c0_11 = arith.constant 0 : index
    %c0_12 = arith.constant 0 : index
    %c0_13 = arith.constant 0 : index
    %10 = vector.load %arg5[%c0_11, %c0_12, %c0_13] : memref<3x1x64xf32, #tpu.memory_space<vmem>>, vector<1x1x64xf32>
    %11 = vector.shape_cast %10 : vector<1x1x64xf32> to vector<1x64xf32>
    %c0_14 = arith.constant 0 : index
    %c0_15 = arith.constant 0 : index
    %c0_16 = arith.constant 0 : index
    %12 = vector.load %arg6[%c0_14, %c0_15, %c0_16] : memref<3x1x64xf32, #tpu.memory_space<vmem>>, vector<1x1x64xf32>
    %13 = vector.shape_cast %12 : vector<1x1x64xf32> to vector<1x64xf32>
    %cst_17 = arith.constant dense<0.000000e+00> : vector<8xf32>
    %14 = vector.multi_reduction <add>, %9, %cst_17 [1] : vector<8x64xf32> to vector<8xf32>
    %15 = vector.shape_cast %14 : vector<8xf32> to vector<8x1xf32>
    %cst_18 = arith.constant 6.400000e+01 : f32
    %16 = vector.broadcast %cst_18 : f32 to vector<8x1xf32>
    %17 = arith.divf %15, %16 : vector<8x1xf32>
    %18 = vector.broadcast %17 : vector<8x1xf32> to vector<8x64xf32>
    %19 = arith.subf %9, %18 : vector<8x64xf32>
    %20 = arith.mulf %19, %19 : vector<8x64xf32>
    %cst_19 = arith.constant dense<0.000000e+00> : vector<8xf32>
    %21 = vector.multi_reduction <add>, %20, %cst_19 [1] : vector<8x64xf32> to vector<8xf32>
    %22 = vector.shape_cast %21 : vector<8xf32> to vector<8x1xf32>
    %cst_20 = arith.constant 6.400000e+01 : f32
    %23 = vector.broadcast %cst_20 : f32 to vector<8x1xf32>
    %24 = arith.divf %22, %23 : vector<8x1xf32>
    %25 = vector.broadcast %17 : vector<8x1xf32> to vector<8x64xf32>
    %26 = arith.subf %9, %25 : vector<8x64xf32>
    %cst_21 = arith.constant 9.99999974E-6 : f32
    %27 = vector.broadcast %cst_21 : f32 to vector<8x1xf32>
    %28 = arith.addf %24, %27 : vector<8x1xf32>
    %29 = math.rsqrt %28 : vector<8x1xf32>
    %30 = vector.broadcast %29 : vector<8x1xf32> to vector<8x64xf32>
    %31 = arith.mulf %26, %30 : vector<8x64xf32>
    %32 = vector.broadcast %11 : vector<1x64xf32> to vector<8x64xf32>
    %33 = arith.mulf %31, %32 : vector<8x64xf32>
    %34 = vector.broadcast %13 : vector<1x64xf32> to vector<8x64xf32>
    %35 = arith.addf %33, %34 : vector<8x64xf32>
    %cst_22 = arith.constant 0.000000e+00 : f32
    %36 = vector.broadcast %cst_22 : f32 to vector<8x64xf32>
    %37 = arith.maximumf %35, %36 : vector<8x64xf32>
    %c0_23 = arith.constant 0 : index
    %c0_24 = arith.constant 0 : index
    %c0_25 = arith.constant 0 : index
    %38 = vector.load %arg7[%c0_23, %c0_24, %c0_25] : memref<3x64x32xf32, #tpu.memory_space<vmem>>, vector<1x64x32xf32>
    %39 = vector.shape_cast %38 : vector<1x64x32xf32> to vector<64x32xf32>
    %cst_26 = arith.constant dense<0.000000e+00> : vector<8x32xf32>
    %40 = tpu.matmul %37, %39, %cst_26 {dimension_numbers = #tpu.dot_dimension_numbers<[1], [0], [0], [1], [0, 0, 1, 1], [], []>} : vector<8x64xf32>, vector<64x32xf32>, vector<8x32xf32> -> vector<8x32xf32>
    %c0_27 = arith.constant 0 : index
    %c0_28 = arith.constant 0 : index
    %c0_29 = arith.constant 0 : index
    %41 = vector.load %arg8[%c0_27, %c0_28, %c0_29] : memref<3x1x32xf32, #tpu.memory_space<vmem>>, vector<1x1x32xf32>
    %42 = vector.shape_cast %41 : vector<1x1x32xf32> to vector<1x32xf32>
    %43 = vector.broadcast %42 : vector<1x32xf32> to vector<8x32xf32>
    %44 = arith.addf %40, %43 : vector<8x32xf32>
    %c0_30 = arith.constant 0 : index
    %c0_31 = arith.constant 0 : index
    %c0_32 = arith.constant 0 : index
    %45 = vector.load %arg9[%c0_30, %c0_31, %c0_32] : memref<3x1x32xf32, #tpu.memory_space<vmem>>, vector<1x1x32xf32>
    %46 = vector.shape_cast %45 : vector<1x1x32xf32> to vector<1x32xf32>
    %c0_33 = arith.constant 0 : index
    %c0_34 = arith.constant 0 : index
    %c0_35 = arith.constant 0 : index
    %47 = vector.load %arg10[%c0_33, %c0_34, %c0_35] : memref<3x1x32xf32, #tpu.memory_space<vmem>>, vector<1x1x32xf32>
    %48 = vector.shape_cast %47 : vector<1x1x32xf32> to vector<1x32xf32>
    %cst_36 = arith.constant dense<0.000000e+00> : vector<8xf32>
    %49 = vector.multi_reduction <add>, %44, %cst_36 [1] : vector<8x32xf32> to vector<8xf32>
    %50 = vector.shape_cast %49 : vector<8xf32> to vector<8x1xf32>
    %cst_37 = arith.constant 3.200000e+01 : f32
    %51 = vector.broadcast %cst_37 : f32 to vector<8x1xf32>
    %52 = arith.divf %50, %51 : vector<8x1xf32>
    %53 = vector.broadcast %52 : vector<8x1xf32> to vector<8x32xf32>
    %54 = arith.subf %44, %53 : vector<8x32xf32>
    %55 = arith.mulf %54, %54 : vector<8x32xf32>
    %cst_38 = arith.constant dense<0.000000e+00> : vector<8xf32>
    %56 = vector.multi_reduction <add>, %55, %cst_38 [1] : vector<8x32xf32> to vector<8xf32>
    %57 = vector.shape_cast %56 : vector<8xf32> to vector<8x1xf32>
    %cst_39 = arith.constant 3.200000e+01 : f32
    %58 = vector.broadcast %cst_39 : f32 to vector<8x1xf32>
    %59 = arith.divf %57, %58 : vector<8x1xf32>
    %60 = vector.broadcast %52 : vector<8x1xf32> to vector<8x32xf32>
    %61 = arith.subf %44, %60 : vector<8x32xf32>
    %cst_40 = arith.constant 9.99999974E-6 : f32
    %62 = vector.broadcast %cst_40 : f32 to vector<8x1xf32>
    %63 = arith.addf %59, %62 : vector<8x1xf32>
    %64 = math.rsqrt %63 : vector<8x1xf32>
    %65 = vector.broadcast %64 : vector<8x1xf32> to vector<8x32xf32>
    %66 = arith.mulf %61, %65 : vector<8x32xf32>
    %67 = vector.broadcast %46 : vector<1x32xf32> to vector<8x32xf32>
    %68 = arith.mulf %66, %67 : vector<8x32xf32>
    %69 = vector.broadcast %48 : vector<1x32xf32> to vector<8x32xf32>
    %70 = arith.addf %68, %69 : vector<8x32xf32>
    %cst_41 = arith.constant 0.000000e+00 : f32
    %71 = vector.broadcast %cst_41 : f32 to vector<8x32xf32>
    %72 = arith.maximumf %70, %71 : vector<8x32xf32>
    %c1 = arith.constant 1 : index
    %c0_42 = arith.constant 0 : index
    %c0_43 = arith.constant 0 : index
    %73 = vector.load %arg3[%c1, %c0_42, %c0_43] : memref<3x64x64xf32, #tpu.memory_space<vmem>>, vector<1x64x64xf32>
    %74 = vector.shape_cast %73 : vector<1x64x64xf32> to vector<64x64xf32>
    %cst_44 = arith.constant dense<0.000000e+00> : vector<8x64xf32>
    %75 = tpu.matmul %1, %74, %cst_44 {dimension_numbers = #tpu.dot_dimension_numbers<[1], [0], [0], [1], [0, 0, 1, 1], [], []>} : vector<8x64xf32>, vector<64x64xf32>, vector<8x64xf32> -> vector<8x64xf32>
    %c1_45 = arith.constant 1 : index
    %c0_46 = arith.constant 0 : index
    %c0_47 = arith.constant 0 : index
    %76 = vector.load %arg4[%c1_45, %c0_46, %c0_47] : memref<3x1x64xf32, #tpu.memory_space<vmem>>, vector<1x1x64xf32>
    %77 = vector.shape_cast %76 : vector<1x1x64xf32> to vector<1x64xf32>
    %78 = vector.broadcast %77 : vector<1x64xf32> to vector<8x64xf32>
    %79 = arith.addf %75, %78 : vector<8x64xf32>
    %c1_48 = arith.constant 1 : index
    %c0_49 = arith.constant 0 : index
    %c0_50 = arith.constant 0 : index
    %80 = vector.load %arg5[%c1_48, %c0_49, %c0_50] : memref<3x1x64xf32, #tpu.memory_space<vmem>>, vector<1x1x64xf32>
    %81 = vector.shape_cast %80 : vector<1x1x64xf32> to vector<1x64xf32>
    %c1_51 = arith.constant 1 : index
    %c0_52 = arith.constant 0 : index
    %c0_53 = arith.constant 0 : index
    %82 = vector.load %arg6[%c1_51, %c0_52, %c0_53] : memref<3x1x64xf32, #tpu.memory_space<vmem>>, vector<1x1x64xf32>
    %83 = vector.shape_cast %82 : vector<1x1x64xf32> to vector<1x64xf32>
    %cst_54 = arith.constant dense<0.000000e+00> : vector<8xf32>
    %84 = vector.multi_reduction <add>, %79, %cst_54 [1] : vector<8x64xf32> to vector<8xf32>
    %85 = vector.shape_cast %84 : vector<8xf32> to vector<8x1xf32>
    %cst_55 = arith.constant 6.400000e+01 : f32
    %86 = vector.broadcast %cst_55 : f32 to vector<8x1xf32>
    %87 = arith.divf %85, %86 : vector<8x1xf32>
    %88 = vector.broadcast %87 : vector<8x1xf32> to vector<8x64xf32>
    %89 = arith.subf %79, %88 : vector<8x64xf32>
    %90 = arith.mulf %89, %89 : vector<8x64xf32>
    %cst_56 = arith.constant dense<0.000000e+00> : vector<8xf32>
    %91 = vector.multi_reduction <add>, %90, %cst_56 [1] : vector<8x64xf32> to vector<8xf32>
    %92 = vector.shape_cast %91 : vector<8xf32> to vector<8x1xf32>
    %cst_57 = arith.constant 6.400000e+01 : f32
    %93 = vector.broadcast %cst_57 : f32 to vector<8x1xf32>
    %94 = arith.divf %92, %93 : vector<8x1xf32>
    %95 = vector.broadcast %87 : vector<8x1xf32> to vector<8x64xf32>
    %96 = arith.subf %79, %95 : vector<8x64xf32>
    %cst_58 = arith.constant 9.99999974E-6 : f32
    %97 = vector.broadcast %cst_58 : f32 to vector<8x1xf32>
    %98 = arith.addf %94, %97 : vector<8x1xf32>
    %99 = math.rsqrt %98 : vector<8x1xf32>
    %100 = vector.broadcast %99 : vector<8x1xf32> to vector<8x64xf32>
    %101 = arith.mulf %96, %100 : vector<8x64xf32>
    %102 = vector.broadcast %81 : vector<1x64xf32> to vector<8x64xf32>
    %103 = arith.mulf %101, %102 : vector<8x64xf32>
    %104 = vector.broadcast %83 : vector<1x64xf32> to vector<8x64xf32>
    %105 = arith.addf %103, %104 : vector<8x64xf32>
    %cst_59 = arith.constant 0.000000e+00 : f32
    %106 = vector.broadcast %cst_59 : f32 to vector<8x64xf32>
    %107 = arith.maximumf %105, %106 : vector<8x64xf32>
    %c1_60 = arith.constant 1 : index
    %c0_61 = arith.constant 0 : index
    %c0_62 = arith.constant 0 : index
    %108 = vector.load %arg7[%c1_60, %c0_61, %c0_62] : memref<3x64x32xf32, #tpu.memory_space<vmem>>, vector<1x64x32xf32>
    %109 = vector.shape_cast %108 : vector<1x64x32xf32> to vector<64x32xf32>
    %cst_63 = arith.constant dense<0.000000e+00> : vector<8x32xf32>
    %110 = tpu.matmul %107, %109, %cst_63 {dimension_numbers = #tpu.dot_dimension_numbers<[1], [0], [0], [1], [0, 0, 1, 1], [], []>} : vector<8x64xf32>, vector<64x32xf32>, vector<8x32xf32> -> vector<8x32xf32>
    %c1_64 = arith.constant 1 : index
    %c0_65 = arith.constant 0 : index
    %c0_66 = arith.constant 0 : index
    %111 = vector.load %arg8[%c1_64, %c0_65, %c0_66] : memref<3x1x32xf32, #tpu.memory_space<vmem>>, vector<1x1x32xf32>
    %112 = vector.shape_cast %111 : vector<1x1x32xf32> to vector<1x32xf32>
    %113 = vector.broadcast %112 : vector<1x32xf32> to vector<8x32xf32>
    %114 = arith.addf %110, %113 : vector<8x32xf32>
    %c1_67 = arith.constant 1 : index
    %c0_68 = arith.constant 0 : index
    %c0_69 = arith.constant 0 : index
    %115 = vector.load %arg9[%c1_67, %c0_68, %c0_69] : memref<3x1x32xf32, #tpu.memory_space<vmem>>, vector<1x1x32xf32>
    %116 = vector.shape_cast %115 : vector<1x1x32xf32> to vector<1x32xf32>
    %c1_70 = arith.constant 1 : index
    %c0_71 = arith.constant 0 : index
    %c0_72 = arith.constant 0 : index
    %117 = vector.load %arg10[%c1_70, %c0_71, %c0_72] : memref<3x1x32xf32, #tpu.memory_space<vmem>>, vector<1x1x32xf32>
    %118 = vector.shape_cast %117 : vector<1x1x32xf32> to vector<1x32xf32>
    %cst_73 = arith.constant dense<0.000000e+00> : vector<8xf32>
    %119 = vector.multi_reduction <add>, %114, %cst_73 [1] : vector<8x32xf32> to vector<8xf32>
    %120 = vector.shape_cast %119 : vector<8xf32> to vector<8x1xf32>
    %cst_74 = arith.constant 3.200000e+01 : f32
    %121 = vector.broadcast %cst_74 : f32 to vector<8x1xf32>
    %122 = arith.divf %120, %121 : vector<8x1xf32>
    %123 = vector.broadcast %122 : vector<8x1xf32> to vector<8x32xf32>
    %124 = arith.subf %114, %123 : vector<8x32xf32>
    %125 = arith.mulf %124, %124 : vector<8x32xf32>
    %cst_75 = arith.constant dense<0.000000e+00> : vector<8xf32>
    %126 = vector.multi_reduction <add>, %125, %cst_75 [1] : vector<8x32xf32> to vector<8xf32>
    %127 = vector.shape_cast %126 : vector<8xf32> to vector<8x1xf32>
    %cst_76 = arith.constant 3.200000e+01 : f32
    %128 = vector.broadcast %cst_76 : f32 to vector<8x1xf32>
    %129 = arith.divf %127, %128 : vector<8x1xf32>
    %130 = vector.broadcast %122 : vector<8x1xf32> to vector<8x32xf32>
    %131 = arith.subf %114, %130 : vector<8x32xf32>
    %cst_77 = arith.constant 9.99999974E-6 : f32
    %132 = vector.broadcast %cst_77 : f32 to vector<8x1xf32>
    %133 = arith.addf %129, %132 : vector<8x1xf32>
    %134 = math.rsqrt %133 : vector<8x1xf32>
    %135 = vector.broadcast %134 : vector<8x1xf32> to vector<8x32xf32>
    %136 = arith.mulf %131, %135 : vector<8x32xf32>
    %137 = vector.broadcast %116 : vector<1x32xf32> to vector<8x32xf32>
    %138 = arith.mulf %136, %137 : vector<8x32xf32>
    %139 = vector.broadcast %118 : vector<1x32xf32> to vector<8x32xf32>
    %140 = arith.addf %138, %139 : vector<8x32xf32>
    %cst_78 = arith.constant 0.000000e+00 : f32
    %141 = vector.broadcast %cst_78 : f32 to vector<8x32xf32>
    %142 = arith.maximumf %140, %141 : vector<8x32xf32>
    %c2 = arith.constant 2 : index
    %c0_79 = arith.constant 0 : index
    %c0_80 = arith.constant 0 : index
    %143 = vector.load %arg3[%c2, %c0_79, %c0_80] : memref<3x64x64xf32, #tpu.memory_space<vmem>>, vector<1x64x64xf32>
    %144 = vector.shape_cast %143 : vector<1x64x64xf32> to vector<64x64xf32>
    %cst_81 = arith.constant dense<0.000000e+00> : vector<8x64xf32>
    %145 = tpu.matmul %2, %144, %cst_81 {dimension_numbers = #tpu.dot_dimension_numbers<[1], [0], [0], [1], [0, 0, 1, 1], [], []>} : vector<8x64xf32>, vector<64x64xf32>, vector<8x64xf32> -> vector<8x64xf32>
    %c2_82 = arith.constant 2 : index
    %c0_83 = arith.constant 0 : index
    %c0_84 = arith.constant 0 : index
    %146 = vector.load %arg4[%c2_82, %c0_83, %c0_84] : memref<3x1x64xf32, #tpu.memory_space<vmem>>, vector<1x1x64xf32>
    %147 = vector.shape_cast %146 : vector<1x1x64xf32> to vector<1x64xf32>
    %148 = vector.broadcast %147 : vector<1x64xf32> to vector<8x64xf32>
    %149 = arith.addf %145, %148 : vector<8x64xf32>
    %c2_85 = arith.constant 2 : index
    %c0_86 = arith.constant 0 : index
    %c0_87 = arith.constant 0 : index
    %150 = vector.load %arg5[%c2_85, %c0_86, %c0_87] : memref<3x1x64xf32, #tpu.memory_space<vmem>>, vector<1x1x64xf32>
    %151 = vector.shape_cast %150 : vector<1x1x64xf32> to vector<1x64xf32>
    %c2_88 = arith.constant 2 : index
    %c0_89 = arith.constant 0 : index
    %c0_90 = arith.constant 0 : index
    %152 = vector.load %arg6[%c2_88, %c0_89, %c0_90] : memref<3x1x64xf32, #tpu.memory_space<vmem>>, vector<1x1x64xf32>
    %153 = vector.shape_cast %152 : vector<1x1x64xf32> to vector<1x64xf32>
    %cst_91 = arith.constant dense<0.000000e+00> : vector<8xf32>
    %154 = vector.multi_reduction <add>, %149, %cst_91 [1] : vector<8x64xf32> to vector<8xf32>
    %155 = vector.shape_cast %154 : vector<8xf32> to vector<8x1xf32>
    %cst_92 = arith.constant 6.400000e+01 : f32
    %156 = vector.broadcast %cst_92 : f32 to vector<8x1xf32>
    %157 = arith.divf %155, %156 : vector<8x1xf32>
    %158 = vector.broadcast %157 : vector<8x1xf32> to vector<8x64xf32>
    %159 = arith.subf %149, %158 : vector<8x64xf32>
    %160 = arith.mulf %159, %159 : vector<8x64xf32>
    %cst_93 = arith.constant dense<0.000000e+00> : vector<8xf32>
    %161 = vector.multi_reduction <add>, %160, %cst_93 [1] : vector<8x64xf32> to vector<8xf32>
    %162 = vector.shape_cast %161 : vector<8xf32> to vector<8x1xf32>
    %cst_94 = arith.constant 6.400000e+01 : f32
    %163 = vector.broadcast %cst_94 : f32 to vector<8x1xf32>
    %164 = arith.divf %162, %163 : vector<8x1xf32>
    %165 = vector.broadcast %157 : vector<8x1xf32> to vector<8x64xf32>
    %166 = arith.subf %149, %165 : vector<8x64xf32>
    %cst_95 = arith.constant 9.99999974E-6 : f32
    %167 = vector.broadcast %cst_95 : f32 to vector<8x1xf32>
    %168 = arith.addf %164, %167 : vector<8x1xf32>
    %169 = math.rsqrt %168 : vector<8x1xf32>
    %170 = vector.broadcast %169 : vector<8x1xf32> to vector<8x64xf32>
    %171 = arith.mulf %166, %170 : vector<8x64xf32>
    %172 = vector.broadcast %151 : vector<1x64xf32> to vector<8x64xf32>
    %173 = arith.mulf %171, %172 : vector<8x64xf32>
    %174 = vector.broadcast %153 : vector<1x64xf32> to vector<8x64xf32>
    %175 = arith.addf %173, %174 : vector<8x64xf32>
    %cst_96 = arith.constant 0.000000e+00 : f32
    %176 = vector.broadcast %cst_96 : f32 to vector<8x64xf32>
    %177 = arith.maximumf %175, %176 : vector<8x64xf32>
    %c2_97 = arith.constant 2 : index
    %c0_98 = arith.constant 0 : index
    %c0_99 = arith.constant 0 : index
    %178 = vector.load %arg7[%c2_97, %c0_98, %c0_99] : memref<3x64x32xf32, #tpu.memory_space<vmem>>, vector<1x64x32xf32>
    %179 = vector.shape_cast %178 : vector<1x64x32xf32> to vector<64x32xf32>
    %cst_100 = arith.constant dense<0.000000e+00> : vector<8x32xf32>
    %180 = tpu.matmul %177, %179, %cst_100 {dimension_numbers = #tpu.dot_dimension_numbers<[1], [0], [0], [1], [0, 0, 1, 1], [], []>} : vector<8x64xf32>, vector<64x32xf32>, vector<8x32xf32> -> vector<8x32xf32>
    %c2_101 = arith.constant 2 : index
    %c0_102 = arith.constant 0 : index
    %c0_103 = arith.constant 0 : index
    %181 = vector.load %arg8[%c2_101, %c0_102, %c0_103] : memref<3x1x32xf32, #tpu.memory_space<vmem>>, vector<1x1x32xf32>
    %182 = vector.shape_cast %181 : vector<1x1x32xf32> to vector<1x32xf32>
    %183 = vector.broadcast %182 : vector<1x32xf32> to vector<8x32xf32>
    %184 = arith.addf %180, %183 : vector<8x32xf32>
    %c2_104 = arith.constant 2 : index
    %c0_105 = arith.constant 0 : index
    %c0_106 = arith.constant 0 : index
    %185 = vector.load %arg9[%c2_104, %c0_105, %c0_106] : memref<3x1x32xf32, #tpu.memory_space<vmem>>, vector<1x1x32xf32>
    %186 = vector.shape_cast %185 : vector<1x1x32xf32> to vector<1x32xf32>
    %c2_107 = arith.constant 2 : index
    %c0_108 = arith.constant 0 : index
    %c0_109 = arith.constant 0 : index
    %187 = vector.load %arg10[%c2_107, %c0_108, %c0_109] : memref<3x1x32xf32, #tpu.memory_space<vmem>>, vector<1x1x32xf32>
    %188 = vector.shape_cast %187 : vector<1x1x32xf32> to vector<1x32xf32>
    %cst_110 = arith.constant dense<0.000000e+00> : vector<8xf32>
    %189 = vector.multi_reduction <add>, %184, %cst_110 [1] : vector<8x32xf32> to vector<8xf32>
    %190 = vector.shape_cast %189 : vector<8xf32> to vector<8x1xf32>
    %cst_111 = arith.constant 3.200000e+01 : f32
    %191 = vector.broadcast %cst_111 : f32 to vector<8x1xf32>
    %192 = arith.divf %190, %191 : vector<8x1xf32>
    %193 = vector.broadcast %192 : vector<8x1xf32> to vector<8x32xf32>
    %194 = arith.subf %184, %193 : vector<8x32xf32>
    %195 = arith.mulf %194, %194 : vector<8x32xf32>
    %cst_112 = arith.constant dense<0.000000e+00> : vector<8xf32>
    %196 = vector.multi_reduction <add>, %195, %cst_112 [1] : vector<8x32xf32> to vector<8xf32>
    %197 = vector.shape_cast %196 : vector<8xf32> to vector<8x1xf32>
    %cst_113 = arith.constant 3.200000e+01 : f32
    %198 = vector.broadcast %cst_113 : f32 to vector<8x1xf32>
    %199 = arith.divf %197, %198 : vector<8x1xf32>
    %200 = vector.broadcast %192 : vector<8x1xf32> to vector<8x32xf32>
    %201 = arith.subf %184, %200 : vector<8x32xf32>
    %cst_114 = arith.constant 9.99999974E-6 : f32
    %202 = vector.broadcast %cst_114 : f32 to vector<8x1xf32>
    %203 = arith.addf %199, %202 : vector<8x1xf32>
    %204 = math.rsqrt %203 : vector<8x1xf32>
    %205 = vector.broadcast %204 : vector<8x1xf32> to vector<8x32xf32>
    %206 = arith.mulf %201, %205 : vector<8x32xf32>
    %207 = vector.broadcast %186 : vector<1x32xf32> to vector<8x32xf32>
    %208 = arith.mulf %206, %207 : vector<8x32xf32>
    %209 = vector.broadcast %188 : vector<1x32xf32> to vector<8x32xf32>
    %210 = arith.addf %208, %209 : vector<8x32xf32>
    %cst_115 = arith.constant 0.000000e+00 : f32
    %211 = vector.broadcast %cst_115 : f32 to vector<8x32xf32>
    %212 = arith.maximumf %210, %211 : vector<8x32xf32>
    %213 = arith.addf %72, %142 : vector<8x32xf32>
    %214 = arith.addf %213, %212 : vector<8x32xf32>
    %c0_116 = arith.constant 0 : index
    %c0_117 = arith.constant 0 : index
    %215 = vector.load %arg11[%c0_116, %c0_117] : memref<1x32xf32, #tpu.memory_space<vmem>>, vector<1x32xf32>
    %c0_118 = arith.constant 0 : index
    %c0_119 = arith.constant 0 : index
    %216 = vector.load %arg12[%c0_118, %c0_119] : memref<1x32xf32, #tpu.memory_space<vmem>>, vector<1x32xf32>
    %cst_120 = arith.constant dense<0.000000e+00> : vector<8xf32>
    %217 = vector.multi_reduction <add>, %214, %cst_120 [1] : vector<8x32xf32> to vector<8xf32>
    %218 = vector.shape_cast %217 : vector<8xf32> to vector<8x1xf32>
    %cst_121 = arith.constant 3.200000e+01 : f32
    %219 = vector.broadcast %cst_121 : f32 to vector<8x1xf32>
    %220 = arith.divf %218, %219 : vector<8x1xf32>
    %221 = vector.broadcast %220 : vector<8x1xf32> to vector<8x32xf32>
    %222 = arith.subf %214, %221 : vector<8x32xf32>
    %223 = arith.mulf %222, %222 : vector<8x32xf32>
    %cst_122 = arith.constant dense<0.000000e+00> : vector<8xf32>
    %224 = vector.multi_reduction <add>, %223, %cst_122 [1] : vector<8x32xf32> to vector<8xf32>
    %225 = vector.shape_cast %224 : vector<8xf32> to vector<8x1xf32>
    %cst_123 = arith.constant 3.200000e+01 : f32
    %226 = vector.broadcast %cst_123 : f32 to vector<8x1xf32>
    %227 = arith.divf %225, %226 : vector<8x1xf32>
    %228 = vector.broadcast %220 : vector<8x1xf32> to vector<8x32xf32>
    %229 = arith.subf %214, %228 : vector<8x32xf32>
    %cst_124 = arith.constant 9.99999974E-6 : f32
    %230 = vector.broadcast %cst_124 : f32 to vector<8x1xf32>
    %231 = arith.addf %227, %230 : vector<8x1xf32>
    %232 = math.rsqrt %231 : vector<8x1xf32>
    %233 = vector.broadcast %232 : vector<8x1xf32> to vector<8x32xf32>
    %234 = arith.mulf %229, %233 : vector<8x32xf32>
    %235 = vector.broadcast %215 : vector<1x32xf32> to vector<8x32xf32>
    %236 = arith.mulf %234, %235 : vector<8x32xf32>
    %237 = vector.broadcast %216 : vector<1x32xf32> to vector<8x32xf32>
    %238 = arith.addf %236, %237 : vector<8x32xf32>
    %239 = tpu.concatenate %72, %142, %212, %238 in 1 : vector<8x32xf32>, vector<8x32xf32>, vector<8x32xf32>, vector<8x32xf32> -> vector<8x128xf32>
    %c0_125 = arith.constant 0 : index
    %c0_126 = arith.constant 0 : index
    %240 = vector.load %arg17[%c0_125, %c0_126] : memref<8x128xf32, #tpu.memory_space<vmem>>, vector<8x128xf32>
    tpu.vector_store %arg17[%c0_125, %c0_126], %239 {strides = array<i32>} : memref<8x128xf32, #tpu.memory_space<vmem>>, vector<8x128xf32>,
    %c0_127 = arith.constant 0 : index
    %c0_128 = arith.constant 0 : index
    %241 = vector.load %arg13[%c0_127, %c0_128] : memref<128x8xf32, #tpu.memory_space<vmem>>, vector<128x8xf32>
    %cst_129 = arith.constant dense<0.000000e+00> : vector<8x8xf32>
    %242 = tpu.matmul %239, %241, %cst_129 {dimension_numbers = #tpu.dot_dimension_numbers<[1], [0], [0], [1], [0, 0, 1, 1], [], []>} : vector<8x128xf32>, vector<128x8xf32>, vector<8x8xf32> -> vector<8x8xf32>
    %c0_130 = arith.constant 0 : index
    %c0_131 = arith.constant 0 : index
    %243 = vector.load %arg14[%c0_130, %c0_131] : memref<1x8xf32, #tpu.memory_space<vmem>>, vector<1x8xf32>
    %244 = vector.broadcast %243 : vector<1x8xf32> to vector<8x8xf32>
    %245 = arith.addf %242, %244 : vector<8x8xf32>
    %246 = arith.negf %245 : vector<8x8xf32>
    %247 = math.exp %246 : vector<8x8xf32>
    %cst_132 = arith.constant 1.000000e+00 : f32
    %248 = vector.broadcast %cst_132 : f32 to vector<8x8xf32>
    %249 = arith.addf %248, %247 : vector<8x8xf32>
    %250 = arith.divf %248, %249 : vector<8x8xf32>
    %c0_133 = arith.constant 0 : index
    %c0_134 = arith.constant 0 : index
    %251 = vector.load %arg15[%c0_133, %c0_134] : memref<8x16xf32, #tpu.memory_space<vmem>>, vector<8x16xf32>
    %cst_135 = arith.constant dense<0.000000e+00> : vector<8x16xf32>
    %252 = tpu.matmul %250, %251, %cst_135 {dimension_numbers = #tpu.dot_dimension_numbers<[1], [0], [0], [1], [0, 0, 1, 1], [], []>} : vector<8x8xf32>, vector<8x16xf32>, vector<8x16xf32> -> vector<8x16xf32>
    %c0_136 = arith.constant 0 : index
    %c0_137 = arith.constant 0 : index
    %253 = vector.load %arg16[%c0_136, %c0_137] : memref<1x16xf32, #tpu.memory_space<vmem>>, vector<1x16xf32>
    %254 = vector.broadcast %253 : vector<1x16xf32> to vector<8x16xf32>
    %255 = arith.addf %252, %254 : vector<8x16xf32>
    %c0_138 = arith.constant 0 : index
    %c0_139 = arith.constant 0 : index
    %256 = vector.load %arg18[%c0_138, %c0_139] : memref<8x16xf32, #tpu.memory_space<vmem>>, vector<8x16xf32>
    tpu.vector_store %arg18[%c0_138, %c0_139], %255 {strides = array<i32>} : memref<8x16xf32, #tpu.memory_space<vmem>>, vector<8x16xf32>,
    return
  }
}

</mosaic_0001>

<llo_original>
// kernel: predictor_forward.1
$region0: #{predictor_forward.1}
  #allocation0 [shape = 'u32[]', space=smem, size = 0x4, offset = 0x4, fixed_abs, tag = 'smem constant byte address 0x4 - core index']
  #allocation1 [shape = 'u32[144,128]{1,0:T(1,128)}', space=vmem, size = 0x12000, scoped, tag = 'internal scratch']
  %s0 = inlined_call_operand.vmem [shape: f32[8,64], index: 0, kind: input, shape index: {}]
  %s1 = inlined_call_operand.vmem [shape: f32[8,64], index: 1, kind: input, shape index: {}]
  %s2 = inlined_call_operand.vmem [shape: f32[8,64], index: 2, kind: input, shape index: {}]
  %s3 = inlined_call_operand.vmem [shape: f32[3,64,64], index: 3, kind: input, shape index: {}]
  %s4 = inlined_call_operand.vmem [shape: f32[3,1,64], index: 4, kind: input, shape index: {}]
  %s5 = inlined_call_operand.vmem [shape: f32[3,1,64], index: 5, kind: input, shape index: {}]
  %s6 = inlined_call_operand.vmem [shape: f32[3,1,64], index: 6, kind: input, shape index: {}]
  %s7 = inlined_call_operand.vmem [shape: f32[3,64,32], index: 7, kind: input, shape index: {}]
  %s8 = inlined_call_operand.vmem [shape: f32[3,1,32], index: 8, kind: input, shape index: {}]
  %s9 = inlined_call_operand.vmem [shape: f32[3,1,32], index: 9, kind: input, shape index: {}]
  %s10 = inlined_call_operand.vmem [shape: f32[3,1,32], index: 10, kind: input, shape index: {}]
  %s11 = inlined_call_operand.vmem [shape: f32[1,32], index: 11, kind: input, shape index: {}]
  %s12 = inlined_call_operand.vmem [shape: f32[1,32], index: 12, kind: input, shape index: {}]
  %s13 = inlined_call_operand.vmem [shape: f32[128,8], index: 13, kind: input, shape index: {}]
  %s14 = inlined_call_operand.vmem [shape: f32[1,8], index: 14, kind: input, shape index: {}]
  %s15 = inlined_call_operand.vmem [shape: f32[8,16], index: 15, kind: input, shape index: {}]
  %s16 = inlined_call_operand.vmem [shape: f32[1,16], index: 16, kind: input, shape index: {}]
  %s17 = inlined_call_operand.vmem [shape: f32[8,128], index: 17, kind: output, shape index: {0}]
  %s18 = inlined_call_operand.hbm [shape: f32[8,16], index: 18, kind: output, shape index: {1}]
  %19 = xla_tuple %s17, %s18
  %s20 = sld [smem:[#allocation0]]
  $region86: #{predictor_forward.1} parent=0
    _
  %s22 = ssub.s32 1, %s20
  %s23 = scalar_select 0, %s22, %s20
  $region1: #{predictor_forward.1} parent=0
    #allocation2 [shape = 'u8[4096]{0}', space=vmem, size = 0x1000, scoped, tag = 'output window, operand 1, single buffered']
    #allocation3 [shape = 's32[1]{0}', space=sflag, size = 0x4, scoped, tag = 'scoped memory for predictor_forward.1']
    %24 = vsyncpa [#allocation3], 0
    // Predicated region
    $region2: #{predictor_forward.1} parent=1 // pred_check
      _
    $region3: #{predictor_forward.1} parent=1 // pred_check_branch
      %26 = sbr.rel (0) target = $region5
    $region4: #{predictor_forward.1} parent=1 // pred_region
      _
    $region5: #{predictor_forward.1} parent=1 // pred_fallthru
      _
    // Predicated region
    $region6: #{predictor_forward.1} parent=1 // pred_check
      _
    $region7: #{predictor_forward.1} parent=1 // pred_check_branch
      %28 = sbr.rel (0) target = $region9
    $region8: #{predictor_forward.1} parent=1 // pred_region
      _
    $region9: #{predictor_forward.1} parent=1 // pred_fallthru
      _
    // Predicated region
    $region10: #{predictor_forward.1} parent=1 // pred_check
      _
    $region11: #{predictor_forward.1} parent=1 // pred_check_branch
      %30 = sbr.rel (0) target = $region13
    $region12: #{predictor_forward.1} parent=1 // pred_region
      _
    $region13: #{predictor_forward.1} parent=1 // pred_fallthru
      _
    // Predicated region
    $region14: #{predictor_forward.1} parent=1 // pred_check
      _
    $region15: #{predictor_forward.1} parent=1 // pred_check_branch
      %32 = sbr.rel (0) target = $region17
    $region16: #{predictor_forward.1} parent=1 // pred_region
      _
    $region17: #{predictor_forward.1} parent=1 // pred_fallthru
      _
    // Predicated region
    $region18: #{predictor_forward.1} parent=1 // pred_check
      _
    $region19: #{predictor_forward.1} parent=1 // pred_check_branch
      %34 = sbr.rel (0) target = $region21
    $region20: #{predictor_forward.1} parent=1 // pred_region
      _
    $region21: #{predictor_forward.1} parent=1 // pred_fallthru
      _
    // Predicated region
    $region22: #{predictor_forward.1} parent=1 // pred_check
      _
    $region23: #{predictor_forward.1} parent=1 // pred_check_branch
      %36 = sbr.rel (0) target = $region25
    $region24: #{predictor_forward.1} parent=1 // pred_region
      _
    $region25: #{predictor_forward.1} parent=1 // pred_fallthru
      _
    // Predicated region
    $region26: #{predictor_forward.1} parent=1 // pred_check
      _
    $region27: #{predictor_forward.1} parent=1 // pred_check_branch
      %38 = sbr.rel (0) target = $region29
    $region28: #{predictor_forward.1} parent=1 // pred_region
      _
    $region29: #{predictor_forward.1} parent=1 // pred_fallthru
      _
    // Predicated region
    $region30: #{predictor_forward.1} parent=1 // pred_check
      _
    $region31: #{predictor_forward.1} parent=1 // pred_check_branch
      %40 = sbr.rel (0) target = $region33
    $region32: #{predictor_forward.1} parent=1 // pred_region
      _
    $region33: #{predictor_forward.1} parent=1 // pred_fallthru
      _
    // Predicated region
    $region34: #{predictor_forward.1} parent=1 // pred_check
      _
    $region35: #{predictor_forward.1} parent=1 // pred_check_branch
      %42 = sbr.rel (0) target = $region37
    $region36: #{predictor_forward.1} parent=1 // pred_region
      _
    $region37: #{predictor_forward.1} parent=1 // pred_fallthru
      _
    // Predicated region
    $region38: #{predictor_forward.1} parent=1 // pred_check
      _
    $region39: #{predictor_forward.1} parent=1 // pred_check_branch
      %44 = sbr.rel (0) target = $region41
    $region40: #{predictor_forward.1} parent=1 // pred_region
      _
    $region41: #{predictor_forward.1} parent=1 // pred_fallthru
      _
    // Predicated region
    $region42: #{predictor_forward.1} parent=1 // pred_check
      _
    $region43: #{predictor_forward.1} parent=1 // pred_check_branch
      %46 = sbr.rel (0) target = $region45
    $region44: #{predictor_forward.1} parent=1 // pred_region
      _
    $region45: #{predictor_forward.1} parent=1 // pred_fallthru
      _
    // Predicated region
    $region46: #{predictor_forward.1} parent=1 // pred_check
      _
    $region47: #{predictor_forward.1} parent=1 // pred_check_branch
      %48 = sbr.rel (0) target = $region49
    $region48: #{predictor_forward.1} parent=1 // pred_region
      _
    $region49: #{predictor_forward.1} parent=1 // pred_fallthru
      _
    // Predicated region
    $region50: #{predictor_forward.1} parent=1 // pred_check
      _
    $region51: #{predictor_forward.1} parent=1 // pred_check_branch
      %50 = sbr.rel (0) target = $region53
    $region52: #{predictor_forward.1} parent=1 // pred_region
      _
    $region53: #{predictor_forward.1} parent=1 // pred_fallthru
      _
    // Predicated region
    $region54: #{predictor_forward.1} parent=1 // pred_check
      _
    $region55: #{predictor_forward.1} parent=1 // pred_check_branch
      %52 = sbr.rel (0) target = $region57
    $region56: #{predictor_forward.1} parent=1 // pred_region
      _
    $region57: #{predictor_forward.1} parent=1 // pred_fallthru
      _
    // Predicated region
    $region58: #{predictor_forward.1} parent=1 // pred_check
      _
    $region59: #{predictor_forward.1} parent=1 // pred_check_branch
      %54 = sbr.rel (0) target = $region61
    $region60: #{predictor_forward.1} parent=1 // pred_region
      _
    $region61: #{predictor_forward.1} parent=1 // pred_fallthru
      _
    // Predicated region
    $region62: #{predictor_forward.1} parent=1 // pred_check
      _
    $region63: #{predictor_forward.1} parent=1 // pred_check_branch
      %56 = sbr.rel (0) target = $region65
    $region64: #{predictor_forward.1} parent=1 // pred_region
      _
    $region65: #{predictor_forward.1} parent=1 // pred_fallthru
      _
    // Predicated region
    $region66: #{predictor_forward.1} parent=1 // pred_check
      _
    $region67: #{predictor_forward.1} parent=1 // pred_check_branch
      %58 = sbr.rel (0) target = $region69
    $region68: #{predictor_forward.1} parent=1 // pred_region
      _
    $region69: #{predictor_forward.1} parent=1 // pred_fallthru
      _
    %v59 = vld [vmem:[%s0] sm:$0xff]
    %v60 = vld [vmem:[%s1] sm:$0xff]
    %v61 = vld [vmem:[%s2] sm:$0xff]
    %v62 = vld [vmem:[%s3] sm:$0xff]
    %v63 = vld [vmem:[%s3 + $0x8] sm:$0xff]
    %v64 = vld [vmem:[%s3 + $0x10] sm:$0xff]
    %v65 = vld [vmem:[%s3 + $0x18] sm:$0xff]
    %v66 = vld [vmem:[%s3 + $0x20] sm:$0xff]
    %v67 = vld [vmem:[%s3 + $0x28] sm:$0xff]
    %v68 = vld [vmem:[%s3 + $0x30] sm:$0xff]
    %v69 = vld [vmem:[%s3 + $0x38] sm:$0xff]
    %v70 = vld [vmem:[%s4] sm:$0x1]
    %v72 = vlaneseq
    %v73 = vshrl.u32 %v72, 7
    %v74 = vsub.s32 0, %v73
    %v75 = vrot.slane %v70, %v74
    %vm77 = vcmask 523264
    %v79 = vsel %vm77, %v59, 0
    %81 = vmatprep.subr.mxu0 0.0
    %82 = vmatpush1.msra.mxu0 %v62
    %83 = vmatprep.subr.mxu0 0.0
    %84 = vmatpush1.msra.mxu0 %v63
    %85 = vmatprep.subr.mxu0 0.0
    %86 = vmatpush1.msra.mxu0 %v64
    %87 = vmatprep.subr.mxu0 0.0
    %88 = vmatpush1.msra.mxu0 %v65
    %89 = vmatprep.subr.mxu0 0.0
    %90 = vmatpush1.msra.mxu0 %v66
    %91 = vmatprep.subr.mxu0 0.0
    %92 = vmatpush1.msra.mxu0 %v67
    %93 = vmatprep.subr.mxu0 0.0
    %94 = vmatpush1.msra.mxu0 %v68
    %95 = vmatprep.subr.mxu0 0.0
    %96 = vmatpush1.msra.mxu0 %v69
    %97 = vmatprep.subr.mxu0 0.0
    %98 = vmatpush1.msra.mxu0 0.0
    %99 = vmatprep.subr.mxu0 0.0
    %100 = vmatpush1.msra.mxu0 0.0
    %101 = vmatprep.subr.mxu0 0.0
    %102 = vmatpush1.msra.mxu0 0.0
    %103 = vmatprep.subr.mxu0 0.0
    %104 = vmatpush1.msra.mxu0 0.0
    %105 = vmatprep.subr.mxu0 0.0
    %106 = vmatpush1.msra.mxu0 0.0
    %107 = vmatprep.subr.mxu0 0.0
    %108 = vmatpush1.msra.mxu0 0.0
    %109 = vmatprep.subr.mxu0 0.0
    %110 = vmatpush1.msra.mxu0 0.0
    %111 = vmatprep.subr.mxu0 0.0
    %112 = vmatpush1.msra.mxu0 0.0
    %113 = vmatprep.subr.mxu0 0.0
    %114 = vmatpush1.msra.mxu0 0.0
    %115 = vmatprep.subr.mxu0 0.0
    %116 = vmatpush1.msra.mxu0 0.0
    %117 = vmatprep.subr.mxu0 0.0
    %118 = vmatpush1.msra.mxu0 0.0
    %119 = vmatprep.subr.mxu0 0.0
    %120 = vmatpush1.msra.mxu0 0.0
    %121 = vmatprep.subr.mxu0 0.0
    %122 = vmatpush1.msra.mxu0 0.0
    %123 = vmatprep.subr.mxu0 0.0
    %124 = vmatpush1.msra.mxu0 0.0
    %125 = vmatprep.subr.mxu0 0.0
    %126 = vmatpush1.msra.mxu0 0.0
    %127 = vmatprep.subr.mxu0 0.0
    %128 = vmatpush1.msra.mxu0 0.0
    %129 = vmatprep.subr.mxu0 0.0
    %130 = vmatpush1.msra.mxu0 0.0
    %131 = vmatprep.subr.mxu0 0.0
    %132 = vmatpush1.msra.mxu0 0.0
    %133 = vmatprep.subr.mxu0 0.0
    %134 = vmatpush1.msra.mxu0 0.0
    %135 = vmatprep.subr.mxu0 0.0
    %136 = vmatpush1.msra.mxu0 0.0
    %137 = vmatprep.subr.mxu0 0.0
    %138 = vmatpush1.msra.mxu0 0.0
    %139 = vmatprep.subr.mxu0 0.0
    %140 = vmatpush1.msra.mxu0 0.0
    %141 = vmatprep.subr.mxu0 0.0
    %142 = vmatpush1.msra.mxu0 0.0
    %143 = vmatprep.subr.mxu0 0.0
    %144 = vmatpush1.msra.mxu0 0.0
    %145 = vmatprep.mubr.f32.mxu0 0.0
    %146 = vmatmul.mubr.f32.gmra.mrb[0].mxu0 %v79
    %v147 = vpop.f32.mrb[0].mxu0
    %v148 = vadd.f32 %v75, %v147
    %v149 = vpop.f32.mrb[0].mxu0
    %150 = vdwg.mxu0
    %v151 = vld [vmem:[%s5] sm:$0x1]
    %v152 = vld [vmem:[%s6] sm:$0x1]
    %v153 = vsel %vm77, %v148, 0.0
    %154 = vadd.xlane.f32.xlu0 %v153
    %v155 = vpop.xlane.xlu0 %154
    %v156 = vrcp.pop 64.0
    %v157 = vmul.f32 %v155, %v156
    %v158 = vsub.f32 %v148, %v157
    %v159 = vmul.f32 %v158, %v158
    %v160 = vsel %vm77, %v159, 0.0
    %161 = vadd.xlane.f32.xlu0 %v160
    %v162 = vpop.xlane.xlu0 %161
    %v163 = vmul.f32 %v162, %v156
    %v164 = vadd.f32 %v163, 1e-05
    %v165 = vrsqrt.pop %v164
    %v166 = vmul.f32 %v158, %v165
    %v168 = vlaneseq
    %v169 = vshrl.u32 %v168, 7
    %v170 = vsub.s32 0, %v169
    %v171 = vrot.slane %v151, %v170
    %v173 = vmul.f32 %v166, %v171
    %v175 = vlaneseq
    %v176 = vshrl.u32 %v175, 7
    %v177 = vsub.s32 0, %v176
    %v178 = vrot.slane %v152, %v177
    %v180 = vadd.f32 %v173, %v178
    %v181 = vmax.f32 %v180, 0.0
    %v182 = vld [vmem:[%s7] sm:$0xff]
    %v183 = vld [vmem:[%s7 + $0x8] sm:$0xff]
    %v184 = vld [vmem:[%s7 + $0x10] sm:$0xff]
    %v185 = vld [vmem:[%s7 + $0x18] sm:$0xff]
    %v186 = vld [vmem:[%s7 + $0x20] sm:$0xff]
    %v187 = vld [vmem:[%s7 + $0x28] sm:$0xff]
    %v188 = vld [vmem:[%s7 + $0x30] sm:$0xff]
    %v189 = vld [vmem:[%s7 + $0x38] sm:$0xff]
    %v190 = vld [vmem:[%s8] sm:$0x1]
    %v192 = vlaneseq
    %v193 = vshrl.u32 %v192, 7
    %v194 = vsub.s32 0, %v193
    %v195 = vrot.slane %v190, %v194
    %v198 = vsel %vm77, %v181, 0
    %200 = vmatprep.subr.mxu0 0.0
    %201 = vmatpush1.msra.mxu0 %v182
    %202 = vmatprep.subr.mxu0 0.0
    %203 = vmatpush1.msra.mxu0 %v183
    %204 = vmatprep.subr.mxu0 0.0
    %205 = vmatpush1.msra.mxu0 %v184
    %206 = vmatprep.subr.mxu0 0.0
    %207 = vmatpush1.msra.mxu0 %v185
    %208 = vmatprep.subr.mxu0 0.0
    %209 = vmatpush1.msra.mxu0 %v186
    %210 = vmatprep.subr.mxu0 0.0
    %211 = vmatpush1.msra.mxu0 %v187
    %212 = vmatprep.subr.mxu0 0.0
    %213 = vmatpush1.msra.mxu0 %v188
    %214 = vmatprep.subr.mxu0 0.0
    %215 = vmatpush1.msra.mxu0 %v189
    %216 = vmatprep.subr.mxu0 0.0
    %217 = vmatpush1.msra.mxu0 0.0
    %218 = vmatprep.subr.mxu0 0.0
    %219 = vmatpush1.msra.mxu0 0.0
    %220 = vmatprep.subr.mxu0 0.0
    %221 = vmatpush1.msra.mxu0 0.0
    %222 = vmatprep.subr.mxu0 0.0
    %223 = vmatpush1.msra.mxu0 0.0
    %224 = vmatprep.subr.mxu0 0.0
    %225 = vmatpush1.msra.mxu0 0.0
    %226 = vmatprep.subr.mxu0 0.0
    %227 = vmatpush1.msra.mxu0 0.0
    %228 = vmatprep.subr.mxu0 0.0
    %229 = vmatpush1.msra.mxu0 0.0
    %230 = vmatprep.subr.mxu0 0.0
    %231 = vmatpush1.msra.mxu0 0.0
    %232 = vmatprep.subr.mxu0 0.0
    %233 = vmatpush1.msra.mxu0 0.0
    %234 = vmatprep.subr.mxu0 0.0
    %235 = vmatpush1.msra.mxu0 0.0
    %236 = vmatprep.subr.mxu0 0.0
    %237 = vmatpush1.msra.mxu0 0.0
    %238 = vmatprep.subr.mxu0 0.0
    %239 = vmatpush1.msra.mxu0 0.0
    %240 = vmatprep.subr.mxu0 0.0
    %241 = vmatpush1.msra.mxu0 0.0
    %242 = vmatprep.subr.mxu0 0.0
    %243 = vmatpush1.msra.mxu0 0.0
    %244 = vmatprep.subr.mxu0 0.0
    %245 = vmatpush1.msra.mxu0 0.0
    %246 = vmatprep.subr.mxu0 0.0
    %247 = vmatpush1.msra.mxu0 0.0
    %248 = vmatprep.subr.mxu0 0.0
    %249 = vmatpush1.msra.mxu0 0.0
    %250 = vmatprep.subr.mxu0 0.0
    %251 = vmatpush1.msra.mxu0 0.0
    %252 = vmatprep.subr.mxu0 0.0
    %253 = vmatpush1.msra.mxu0 0.0
    %254 = vmatprep.subr.mxu0 0.0
    %255 = vmatpush1.msra.mxu0 0.0
    %256 = vmatprep.subr.mxu0 0.0
    %257 = vmatpush1.msra.mxu0 0.0
    %258 = vmatprep.subr.mxu0 0.0
    %259 = vmatpush1.msra.mxu0 0.0
    %260 = vmatprep.subr.mxu0 0.0
    %261 = vmatpush1.msra.mxu0 0.0
    %262 = vmatprep.subr.mxu0 0.0
    %263 = vmatpush1.msra.mxu0 0.0
    %264 = vmatprep.mubr.f32.mxu0 0.0
    %265 = vmatmul.mubr.f32.gmra.mrb[0].mxu0 %v198
    %v266 = vpop.f32.mrb[0].mxu0
    %v267 = vadd.f32 %v195, %v266
    %v268 = vpop.f32.mrb[0].mxu0
    %269 = vdwg.mxu0
    %v270 = vld [vmem:[%s9] sm:$0x1]
    %v271 = vld [vmem:[%s10] sm:$0x1]
    %vm272 = vcmask 261120
    %v273 = vsel %vm272, %v267, 0.0
    %274 = vadd.xlane.f32.xlu0 %v273
    %v275 = vpop.xlane.xlu0 %274
    %v276 = vrcp.pop 32.0
    %v277 = vmul.f32 %v275, %v276
    %v278 = vsub.f32 %v267, %v277
    %v279 = vmul.f32 %v278, %v278
    %v280 = vsel %vm272, %v279, 0.0
    %281 = vadd.xlane.f32.xlu0 %v280
    %v282 = vpop.xlane.xlu0 %281
    %v283 = vmul.f32 %v282, %v276
    %v284 = vadd.f32 %v283, 1e-05
    %v285 = vrsqrt.pop %v284
    %v286 = vmul.f32 %v278, %v285
    %v288 = vlaneseq
    %v289 = vshrl.u32 %v288, 7
    %v290 = vsub.s32 0, %v289
    %v291 = vrot.slane %v270, %v290
    %v293 = vmul.f32 %v286, %v291
    %v295 = vlaneseq
    %v296 = vshrl.u32 %v295, 7
    %v297 = vsub.s32 0, %v296
    %v298 = vrot.slane %v271, %v297
    %v300 = vadd.f32 %v293, %v298
    %v301 = vmax.f32 %v300, 0.0
    %s302 = scalar_lea.vmem %s3, 64
    %v303 = vld [vmem:[%s302] sm:$0xff]
    %v304 = vld [vmem:[%s302 + $0x8] sm:$0xff]
    %v305 = vld [vmem:[%s302 + $0x10] sm:$0xff]
    %v306 = vld [vmem:[%s302 + $0x18] sm:$0xff]
    %v307 = vld [vmem:[%s302 + $0x20] sm:$0xff]
    %v308 = vld [vmem:[%s302 + $0x28] sm:$0xff]
    %v309 = vld [vmem:[%s302 + $0x30] sm:$0xff]
    %v310 = vld [vmem:[%s302 + $0x38] sm:$0xff]
    %s311 = scalar_lea.vmem %s4, 1
    %v312 = vld [vmem:[%s311] sm:$0x1]
    %v314 = vlaneseq
    %v315 = vshrl.u32 %v314, 7
    %v316 = vsub.s32 0, %v315
    %v317 = vrot.slane %v312, %v316
    %v320 = vsel %vm77, %v60, 0
    %322 = vmatprep.subr.mxu0 0.0
    %323 = vmatpush1.msra.mxu0 %v303
    %324 = vmatprep.subr.mxu0 0.0
    %325 = vmatpush1.msra.mxu0 %v304
    %326 = vmatprep.subr.mxu0 0.0
    %327 = vmatpush1.msra.mxu0 %v305
    %328 = vmatprep.subr.mxu0 0.0
    %329 = vmatpush1.msra.mxu0 %v306
    %330 = vmatprep.subr.mxu0 0.0
    %331 = vmatpush1.msra.mxu0 %v307
    %332 = vmatprep.subr.mxu0 0.0
    %333 = vmatpush1.msra.mxu0 %v308
    %334 = vmatprep.subr.mxu0 0.0
    %335 = vmatpush1.msra.mxu0 %v309
    %336 = vmatprep.subr.mxu0 0.0
    %337 = vmatpush1.msra.mxu0 %v310
    %338 = vmatprep.subr.mxu0 0.0
    %339 = vmatpush1.msra.mxu0 0.0
    %340 = vmatprep.subr.mxu0 0.0
    %341 = vmatpush1.msra.mxu0 0.0
    %342 = vmatprep.subr.mxu0 0.0
    %343 = vmatpush1.msra.mxu0 0.0
    %344 = vmatprep.subr.mxu0 0.0
    %345 = vmatpush1.msra.mxu0 0.0
    %346 = vmatprep.subr.mxu0 0.0
    %347 = vmatpush1.msra.mxu0 0.0
    %348 = vmatprep.subr.mxu0 0.0
    %349 = vmatpush1.msra.mxu0 0.0
    %350 = vmatprep.subr.mxu0 0.0
    %351 = vmatpush1.msra.mxu0 0.0
    %352 = vmatprep.subr.mxu0 0.0
    %353 = vmatpush1.msra.mxu0 0.0
    %354 = vmatprep.subr.mxu0 0.0
    %355 = vmatpush1.msra.mxu0 0.0
    %356 = vmatprep.subr.mxu0 0.0
    %357 = vmatpush1.msra.mxu0 0.0
    %358 = vmatprep.subr.mxu0 0.0
    %359 = vmatpush1.msra.mxu0 0.0
    %360 = vmatprep.subr.mxu0 0.0
    %361 = vmatpush1.msra.mxu0 0.0
    %362 = vmatprep.subr.mxu0 0.0
    %363 = vmatpush1.msra.mxu0 0.0
    %364 = vmatprep.subr.mxu0 0.0
    %365 = vmatpush1.msra.mxu0 0.0
    %366 = vmatprep.subr.mxu0 0.0
    %367 = vmatpush1.msra.mxu0 0.0
    %368 = vmatprep.subr.mxu0 0.0
    %369 = vmatpush1.msra.mxu0 0.0
    %370 = vmatprep.subr.mxu0 0.0
    %371 = vmatpush1.msra.mxu0 0.0
    %372 = vmatprep.subr.mxu0 0.0
    %373 = vmatpush1.msra.mxu0 0.0
    %374 = vmatprep.subr.mxu0 0.0
    %375 = vmatpush1.msra.mxu0 0.0
    %376 = vmatprep.subr.mxu0 0.0
    %377 = vmatpush1.msra.mxu0 0.0
    %378 = vmatprep.subr.mxu0 0.0
    %379 = vmatpush1.msra.mxu0 0.0
    %380 = vmatprep.subr.mxu0 0.0
    %381 = vmatpush1.msra.mxu0 0.0
    %382 = vmatprep.subr.mxu0 0.0
    %383 = vmatpush1.msra.mxu0 0.0
    %384 = vmatprep.subr.mxu0 0.0
    %385 = vmatpush1.msra.mxu0 0.0
    %386 = vmatprep.mubr.f32.mxu0 0.0
    %387 = vmatmul.mubr.f32.gmra.mrb[0].mxu0 %v320
    %v388 = vpop.f32.mrb[0].mxu0
    %v389 = vadd.f32 %v317, %v388
    %v390 = vpop.f32.mrb[0].mxu0
    %391 = vdwg.mxu0
    %s392 = scalar_lea.vmem %s5, 1
    %v393 = vld [vmem:[%s392] sm:$0x1]
    %s394 = scalar_lea.vmem %s6, 1
    %v395 = vld [vmem:[%s394] sm:$0x1]
    %v396 = vsel %vm77, %v389, 0.0
    %397 = vadd.xlane.f32.xlu0 %v396
    %v398 = vpop.xlane.xlu0 %397
    %v399 = vmul.f32 %v398, %v156
    %v400 = vsub.f32 %v389, %v399
    %v401 = vmul.f32 %v400, %v400
    %v402 = vsel %vm77, %v401, 0.0
    %403 = vadd.xlane.f32.xlu0 %v402
    %v404 = vpop.xlane.xlu0 %403
    %v405 = vmul.f32 %v404, %v156
    %v406 = vadd.f32 %v405, 1e-05
    %v407 = vrsqrt.pop %v406
    %v408 = vmul.f32 %v400, %v407
    %v410 = vlaneseq
    %v411 = vshrl.u32 %v410, 7
    %v412 = vsub.s32 0, %v411
    %v413 = vrot.slane %v393, %v412
    %v415 = vmul.f32 %v408, %v413
    %v417 = vlaneseq
    %v418 = vshrl.u32 %v417, 7
    %v419 = vsub.s32 0, %v418
    %v420 = vrot.slane %v395, %v419
    %v422 = vadd.f32 %v415, %v420
    %v423 = vmax.f32 %v422, 0.0
    %s424 = scalar_lea.vmem %s7, 64
    %v425 = vld [vmem:[%s424] sm:$0xff]
    %v426 = vld [vmem:[%s424 + $0x8] sm:$0xff]
    %v427 = vld [vmem:[%s424 + $0x10] sm:$0xff]
    %v428 = vld [vmem:[%s424 + $0x18] sm:$0xff]
    %v429 = vld [vmem:[%s424 + $0x20] sm:$0xff]
    %v430 = vld [vmem:[%s424 + $0x28] sm:$0xff]
    %v431 = vld [vmem:[%s424 + $0x30] sm:$0xff]
    %v432 = vld [vmem:[%s424 + $0x38] sm:$0xff]
    %s433 = scalar_lea.vmem %s8, 1
    %v434 = vld [vmem:[%s433] sm:$0x1]
    %v436 = vlaneseq
    %v437 = vshrl.u32 %v436, 7
    %v438 = vsub.s32 0, %v437
    %v439 = vrot.slane %v434, %v438
    %v442 = vsel %vm77, %v423, 0
    %444 = vmatprep.subr.mxu0 0.0
    %445 = vmatpush1.msra.mxu0 %v425
    %446 = vmatprep.subr.mxu0 0.0
    %447 = vmatpush1.msra.mxu0 %v426
    %448 = vmatprep.subr.mxu0 0.0
    %449 = vmatpush1.msra.mxu0 %v427
    %450 = vmatprep.subr.mxu0 0.0
    %451 = vmatpush1.msra.mxu0 %v428
    %452 = vmatprep.subr.mxu0 0.0
    %453 = vmatpush1.msra.mxu0 %v429
    %454 = vmatprep.subr.mxu0 0.0
    %455 = vmatpush1.msra.mxu0 %v430
    %456 = vmatprep.subr.mxu0 0.0
    %457 = vmatpush1.msra.mxu0 %v431
    %458 = vmatprep.subr.mxu0 0.0
    %459 = vmatpush1.msra.mxu0 %v432
    %460 = vmatprep.subr.mxu0 0.0
    %461 = vmatpush1.msra.mxu0 0.0
    %462 = vmatprep.subr.mxu0 0.0
    %463 = vmatpush1.msra.mxu0 0.0
    %464 = vmatprep.subr.mxu0 0.0
    %465 = vmatpush1.msra.mxu0 0.0
    %466 = vmatprep.subr.mxu0 0.0
    %467 = vmatpush1.msra.mxu0 0.0
    %468 = vmatprep.subr.mxu0 0.0
    %469 = vmatpush1.msra.mxu0 0.0
    %470 = vmatprep.subr.mxu0 0.0
    %471 = vmatpush1.msra.mxu0 0.0
    %472 = vmatprep.subr.mxu0 0.0
    %473 = vmatpush1.msra.mxu0 0.0
    %474 = vmatprep.subr.mxu0 0.0
    %475 = vmatpush1.msra.mxu0 0.0
    %476 = vmatprep.subr.mxu0 0.0
    %477 = vmatpush1.msra.mxu0 0.0
    %478 = vmatprep.subr.mxu0 0.0
    %479 = vmatpush1.msra.mxu0 0.0
    %480 = vmatprep.subr.mxu0 0.0
    %481 = vmatpush1.msra.mxu0 0.0
    %482 = vmatprep.subr.mxu0 0.0
    %483 = vmatpush1.msra.mxu0 0.0
    %484 = vmatprep.subr.mxu0 0.0
    %485 = vmatpush1.msra.mxu0 0.0
    %486 = vmatprep.subr.mxu0 0.0
    %487 = vmatpush1.msra.mxu0 0.0
    %488 = vmatprep.subr.mxu0 0.0
    %489 = vmatpush1.msra.mxu0 0.0
    %490 = vmatprep.subr.mxu0 0.0
    %491 = vmatpush1.msra.mxu0 0.0
    %492 = vmatprep.subr.mxu0 0.0
    %493 = vmatpush1.msra.mxu0 0.0
    %494 = vmatprep.subr.mxu0 0.0
    %495 = vmatpush1.msra.mxu0 0.0
    %496 = vmatprep.subr.mxu0 0.0
    %497 = vmatpush1.msra.mxu0 0.0
    %498 = vmatprep.subr.mxu0 0.0
    %499 = vmatpush1.msra.mxu0 0.0
    %500 = vmatprep.subr.mxu0 0.0
    %501 = vmatpush1.msra.mxu0 0.0
    %502 = vmatprep.subr.mxu0 0.0
    %503 = vmatpush1.msra.mxu0 0.0
    %504 = vmatprep.subr.mxu0 0.0
    %505 = vmatpush1.msra.mxu0 0.0
    %506 = vmatprep.subr.mxu0 0.0
    %507 = vmatpush1.msra.mxu0 0.0
    %508 = vmatprep.mubr.f32.mxu0 0.0
    %509 = vmatmul.mubr.f32.gmra.mrb[0].mxu0 %v442
    %v510 = vpop.f32.mrb[0].mxu0
    %v511 = vadd.f32 %v439, %v510
    %v512 = vpop.f32.mrb[0].mxu0
    %513 = vdwg.mxu0
    %s514 = scalar_lea.vmem %s9, 1
    %v515 = vld [vmem:[%s514] sm:$0x1]
    %s516 = scalar_lea.vmem %s10, 1
    %v517 = vld [vmem:[%s516] sm:$0x1]
    %v518 = vsel %vm272, %v511, 0.0
    %519 = vadd.xlane.f32.xlu0 %v518
    %v520 = vpop.xlane.xlu0 %519
    %v521 = vmul.f32 %v520, %v276
    %v522 = vsub.f32 %v511, %v521
    %v523 = vmul.f32 %v522, %v522
    %v524 = vsel %vm272, %v523, 0.0
    %525 = vadd.xlane.f32.xlu0 %v524
    %v526 = vpop.xlane.xlu0 %525
    %v527 = vmul.f32 %v526, %v276
    %v528 = vadd.f32 %v527, 1e-05
    %v529 = vrsqrt.pop %v528
    %v530 = vmul.f32 %v522, %v529
    %v532 = vlaneseq
    %v533 = vshrl.u32 %v532, 7
    %v534 = vsub.s32 0, %v533
    %v535 = vrot.slane %v515, %v534
    %v537 = vmul.f32 %v530, %v535
    %v539 = vlaneseq
    %v540 = vshrl.u32 %v539, 7
    %v541 = vsub.s32 0, %v540
    %v542 = vrot.slane %v517, %v541
    %v544 = vadd.f32 %v537, %v542
    %v545 = vmax.f32 %v544, 0.0
    %s546 = scalar_lea.vmem %s3, 128
    %v547 = vld [vmem:[%s546] sm:$0xff]
    %v548 = vld [vmem:[%s546 + $0x8] sm:$0xff]
    %v549 = vld [vmem:[%s546 + $0x10] sm:$0xff]
    %v550 = vld [vmem:[%s546 + $0x18] sm:$0xff]
    %v551 = vld [vmem:[%s546 + $0x20] sm:$0xff]
    %v552 = vld [vmem:[%s546 + $0x28] sm:$0xff]
    %v553 = vld [vmem:[%s546 + $0x30] sm:$0xff]
    %v554 = vld [vmem:[%s546 + $0x38] sm:$0xff]
    %s555 = scalar_lea.vmem %s4, 2
    %v556 = vld [vmem:[%s555] sm:$0x1]
    %v558 = vlaneseq
    %v559 = vshrl.u32 %v558, 7
    %v560 = vsub.s32 0, %v559
    %v561 = vrot.slane %v556, %v560
    %v564 = vsel %vm77, %v61, 0
    %566 = vmatprep.subr.mxu0 0.0
    %567 = vmatpush1.msra.mxu0 %v547
    %568 = vmatprep.subr.mxu0 0.0
    %569 = vmatpush1.msra.mxu0 %v548
    %570 = vmatprep.subr.mxu0 0.0
    %571 = vmatpush1.msra.mxu0 %v549
    %572 = vmatprep.subr.mxu0 0.0
    %573 = vmatpush1.msra.mxu0 %v550
    %574 = vmatprep.subr.mxu0 0.0
    %575 = vmatpush1.msra.mxu0 %v551
    %576 = vmatprep.subr.mxu0 0.0
    %577 = vmatpush1.msra.mxu0 %v552
    %578 = vmatprep.subr.mxu0 0.0
    %579 = vmatpush1.msra.mxu0 %v553
    %580 = vmatprep.subr.mxu0 0.0
    %581 = vmatpush1.msra.mxu0 %v554
    %582 = vmatprep.subr.mxu0 0.0
    %583 = vmatpush1.msra.mxu0 0.0
    %584 = vmatprep.subr.mxu0 0.0
    %585 = vmatpush1.msra.mxu0 0.0
    %586 = vmatprep.subr.mxu0 0.0
    %587 = vmatpush1.msra.mxu0 0.0
    %588 = vmatprep.subr.mxu0 0.0
    %589 = vmatpush1.msra.mxu0 0.0
    %590 = vmatprep.subr.mxu0 0.0
    %591 = vmatpush1.msra.mxu0 0.0
    %592 = vmatprep.subr.mxu0 0.0
    %593 = vmatpush1.msra.mxu0 0.0
    %594 = vmatprep.subr.mxu0 0.0
    %595 = vmatpush1.msra.mxu0 0.0
    %596 = vmatprep.subr.mxu0 0.0
    %597 = vmatpush1.msra.mxu0 0.0
    %598 = vmatprep.subr.mxu0 0.0
    %599 = vmatpush1.msra.mxu0 0.0
    %600 = vmatprep.subr.mxu0 0.0
    %601 = vmatpush1.msra.mxu0 0.0
    %602 = vmatprep.subr.mxu0 0.0
    %603 = vmatpush1.msra.mxu0 0.0
    %604 = vmatprep.subr.mxu0 0.0
    %605 = vmatpush1.msra.mxu0 0.0
    %606 = vmatprep.subr.mxu0 0.0
    %607 = vmatpush1.msra.mxu0 0.0
    %608 = vmatprep.subr.mxu0 0.0
    %609 = vmatpush1.msra.mxu0 0.0
    %610 = vmatprep.subr.mxu0 0.0
    %611 = vmatpush1.msra.mxu0 0.0
    %612 = vmatprep.subr.mxu0 0.0
    %613 = vmatpush1.msra.mxu0 0.0
    %614 = vmatprep.subr.mxu0 0.0
    %615 = vmatpush1.msra.mxu0 0.0
    %616 = vmatprep.subr.mxu0 0.0
    %617 = vmatpush1.msra.mxu0 0.0
    %618 = vmatprep.subr.mxu0 0.0
    %619 = vmatpush1.msra.mxu0 0.0
    %620 = vmatprep.subr.mxu0 0.0
    %621 = vmatpush1.msra.mxu0 0.0
    %622 = vmatprep.subr.mxu0 0.0
    %623 = vmatpush1.msra.mxu0 0.0
    %624 = vmatprep.subr.mxu0 0.0
    %625 = vmatpush1.msra.mxu0 0.0
    %626 = vmatprep.subr.mxu0 0.0
    %627 = vmatpush1.msra.mxu0 0.0
    %628 = vmatprep.subr.mxu0 0.0
    %629 = vmatpush1.msra.mxu0 0.0
    %630 = vmatprep.mubr.f32.mxu0 0.0
    %631 = vmatmul.mubr.f32.gmra.mrb[0].mxu0 %v564
    %v632 = vpop.f32.mrb[0].mxu0
    %v633 = vadd.f32 %v561, %v632
    %v634 = vpop.f32.mrb[0].mxu0
    %635 = vdwg.mxu0
    %s636 = scalar_lea.vmem %s5, 2
    %v637 = vld [vmem:[%s636] sm:$0x1]
    %s638 = scalar_lea.vmem %s6, 2
    %v639 = vld [vmem:[%s638] sm:$0x1]
    %v640 = vsel %vm77, %v633, 0.0
    %641 = vadd.xlane.f32.xlu0 %v640
    %v642 = vpop.xlane.xlu0 %641
    %v643 = vmul.f32 %v642, %v156
    %v644 = vsub.f32 %v633, %v643
    %v645 = vmul.f32 %v644, %v644
    %v646 = vsel %vm77, %v645, 0.0
    %647 = vadd.xlane.f32.xlu0 %v646
    %v648 = vpop.xlane.xlu0 %647
    %v649 = vmul.f32 %v648, %v156
    %v650 = vadd.f32 %v649, 1e-05
    %v651 = vrsqrt.pop %v650
    %v652 = vmul.f32 %v644, %v651
    %v654 = vlaneseq
    %v655 = vshrl.u32 %v654, 7
    %v656 = vsub.s32 0, %v655
    %v657 = vrot.slane %v637, %v656
    %v659 = vmul.f32 %v652, %v657
    %v661 = vlaneseq
    %v662 = vshrl.u32 %v661, 7
    %v663 = vsub.s32 0, %v662
    %v664 = vrot.slane %v639, %v663
    %v666 = vadd.f32 %v659, %v664
    %v667 = vmax.f32 %v666, 0.0
    %s668 = scalar_lea.vmem %s7, 128
    %v669 = vld [vmem:[%s668] sm:$0xff]
    %v670 = vld [vmem:[%s668 + $0x8] sm:$0xff]
    %v671 = vld [vmem:[%s668 + $0x10] sm:$0xff]
    %v672 = vld [vmem:[%s668 + $0x18] sm:$0xff]
    %v673 = vld [vmem:[%s668 + $0x20] sm:$0xff]
    %v674 = vld [vmem:[%s668 + $0x28] sm:$0xff]
    %v675 = vld [vmem:[%s668 + $0x30] sm:$0xff]
    %v676 = vld [vmem:[%s668 + $0x38] sm:$0xff]
    %s677 = scalar_lea.vmem %s8, 2
    %v678 = vld [vmem:[%s677] sm:$0x1]
    %v680 = vlaneseq
    %v681 = vshrl.u32 %v680, 7
    %v682 = vsub.s32 0, %v681
    %v683 = vrot.slane %v678, %v682
    %v686 = vsel %vm77, %v667, 0
    %688 = vmatprep.subr.mxu0 0.0
    %689 = vmatpush1.msra.mxu0 %v669
    %690 = vmatprep.subr.mxu0 0.0
    %691 = vmatpush1.msra.mxu0 %v670
    %692 = vmatprep.subr.mxu0 0.0
    %693 = vmatpush1.msra.mxu0 %v671
    %694 = vmatprep.subr.mxu0 0.0
    %695 = vmatpush1.msra.mxu0 %v672
    %696 = vmatprep.subr.mxu0 0.0
    %697 = vmatpush1.msra.mxu0 %v673
    %698 = vmatprep.subr.mxu0 0.0
    %699 = vmatpush1.msra.mxu0 %v674
    %700 = vmatprep.subr.mxu0 0.0
    %701 = vmatpush1.msra.mxu0 %v675
    %702 = vmatprep.subr.mxu0 0.0
    %703 = vmatpush1.msra.mxu0 %v676
    %704 = vmatprep.subr.mxu0 0.0
    %705 = vmatpush1.msra.mxu0 0.0
    %706 = vmatprep.subr.mxu0 0.0
    %707 = vmatpush1.msra.mxu0 0.0
    %708 = vmatprep.subr.mxu0 0.0
    %709 = vmatpush1.msra.mxu0 0.0
    %710 = vmatprep.subr.mxu0 0.0
    %711 = vmatpush1.msra.mxu0 0.0
    %712 = vmatprep.subr.mxu0 0.0
    %713 = vmatpush1.msra.mxu0 0.0
    %714 = vmatprep.subr.mxu0 0.0
    %715 = vmatpush1.msra.mxu0 0.0
    %716 = vmatprep.subr.mxu0 0.0
    %717 = vmatpush1.msra.mxu0 0.0
    %718 = vmatprep.subr.mxu0 0.0
    %719 = vmatpush1.msra.mxu0 0.0
    %720 = vmatprep.subr.mxu0 0.0
    %721 = vmatpush1.msra.mxu0 0.0
    %722 = vmatprep.subr.mxu0 0.0
    %723 = vmatpush1.msra.mxu0 0.0
    %724 = vmatprep.subr.mxu0 0.0
    %725 = vmatpush1.msra.mxu0 0.0
    %726 = vmatprep.subr.mxu0 0.0
    %727 = vmatpush1.msra.mxu0 0.0
    %728 = vmatprep.subr.mxu0 0.0
    %729 = vmatpush1.msra.mxu0 0.0
    %730 = vmatprep.subr.mxu0 0.0
    %731 = vmatpush1.msra.mxu0 0.0
    %732 = vmatprep.subr.mxu0 0.0
    %733 = vmatpush1.msra.mxu0 0.0
    %734 = vmatprep.subr.mxu0 0.0
    %735 = vmatpush1.msra.mxu0 0.0
    %736 = vmatprep.subr.mxu0 0.0
    %737 = vmatpush1.msra.mxu0 0.0
    %738 = vmatprep.subr.mxu0 0.0
    %739 = vmatpush1.msra.mxu0 0.0
    %740 = vmatprep.subr.mxu0 0.0
    %741 = vmatpush1.msra.mxu0 0.0
    %742 = vmatprep.subr.mxu0 0.0
    %743 = vmatpush1.msra.mxu0 0.0
    %744 = vmatprep.subr.mxu0 0.0
    %745 = vmatpush1.msra.mxu0 0.0
    %746 = vmatprep.subr.mxu0 0.0
    %747 = vmatpush1.msra.mxu0 0.0
    %748 = vmatprep.subr.mxu0 0.0
    %749 = vmatpush1.msra.mxu0 0.0
    %750 = vmatprep.subr.mxu0 0.0
    %751 = vmatpush1.msra.mxu0 0.0
    %752 = vmatprep.mubr.f32.mxu0 0.0
    %753 = vmatmul.mubr.f32.gmra.mrb[0].mxu0 %v686
    %v754 = vpop.f32.mrb[0].mxu0
    %v755 = vadd.f32 %v683, %v754
    %v756 = vpop.f32.mrb[0].mxu0
    %757 = vdwg.mxu0
    %s758 = scalar_lea.vmem %s9, 2
    %v759 = vld [vmem:[%s758] sm:$0x1]
    %s760 = scalar_lea.vmem %s10, 2
    %v761 = vld [vmem:[%s760] sm:$0x1]
    %v762 = vsel %vm272, %v755, 0.0
    %763 = vadd.xlane.f32.xlu0 %v762
    %v764 = vpop.xlane.xlu0 %763
    %v765 = vmul.f32 %v764, %v276
    %v766 = vsub.f32 %v755, %v765
    %v767 = vmul.f32 %v766, %v766
    %v768 = vsel %vm272, %v767, 0.0
    %769 = vadd.xlane.f32.xlu0 %v768
    %v770 = vpop.xlane.xlu0 %769
    %v771 = vmul.f32 %v770, %v276
    %v772 = vadd.f32 %v771, 1e-05
    %v773 = vrsqrt.pop %v772
    %v774 = vmul.f32 %v766, %v773
    %v776 = vlaneseq
    %v777 = vshrl.u32 %v776, 7
    %v778 = vsub.s32 0, %v777
    %v779 = vrot.slane %v759, %v778
    %v781 = vmul.f32 %v774, %v779
    %v783 = vlaneseq
    %v784 = vshrl.u32 %v783, 7
    %v785 = vsub.s32 0, %v784
    %v786 = vrot.slane %v761, %v785
    %v788 = vadd.f32 %v781, %v786
    %v789 = vmax.f32 %v788, 0.0
    %v790 = vadd.f32 %v301, %v545
    %v791 = vadd.f32 %v790, %v789
    %v792 = vld [vmem:[%s11] sm:$0x1]
    %v793 = vld [vmem:[%s12] sm:$0x1]
    %v794 = vsel %vm272, %v791, 0.0
    %795 = vadd.xlane.f32.xlu0 %v794
    %v796 = vpop.xlane.xlu0 %795
    %v797 = vmul.f32 %v796, %v276
    %v798 = vsub.f32 %v791, %v797
    %v799 = vmul.f32 %v798, %v798
    %v800 = vsel %vm272, %v799, 0.0
    %801 = vadd.xlane.f32.xlu0 %v800
    %v802 = vpop.xlane.xlu0 %801
    %v803 = vmul.f32 %v802, %v276
    %v804 = vadd.f32 %v803, 1e-05
    %v805 = vrsqrt.pop %v804
    %v806 = vmul.f32 %v798, %v805
    %v808 = vlaneseq
    %v809 = vshrl.u32 %v808, 7
    %v810 = vsub.s32 0, %v809
    %v811 = vrot.slane %v792, %v810
    %v813 = vmul.f32 %v806, %v811
    %v815 = vlaneseq
    %v816 = vshrl.u32 %v815, 7
    %v817 = vsub.s32 0, %v816
    %v818 = vrot.slane %v793, %v817
    %v820 = vadd.f32 %v813, %v818
    %822 = vrot.lane.b32.xlu0 %v545, 32
    %v823 = vpop.permute.xlu0 %822
    %826 = vrot.lane.b32.xlu0 %v789, 64
    %v827 = vpop.permute.xlu0 %826
    %830 = vrot.lane.b32.xlu0 %v820, 96
    %v831 = vpop.permute.xlu0 %830
    %v833 = vsel %vm272, %v301, %v823
    %v834 = vsel %vm77, %v833, %v827
    %vm835 = vcmask 785408
    %v836 = vsel %vm835, %v834, %v831
    %837 = vst [vmem:[%s17] sm:$0xff] %v836
    %v838 = vld [vmem:[%s13] sm:$0xff]
    %v839 = vld [vmem:[%s13 + $0x8] sm:$0xff]
    %v840 = vld [vmem:[%s13 + $0x10] sm:$0xff]
    %v841 = vld [vmem:[%s13 + $0x18] sm:$0xff]
    %v842 = vld [vmem:[%s13 + $0x20] sm:$0xff]
    %v843 = vld [vmem:[%s13 + $0x28] sm:$0xff]
    %v844 = vld [vmem:[%s13 + $0x30] sm:$0xff]
    %v845 = vld [vmem:[%s13 + $0x38] sm:$0xff]
    %v846 = vld [vmem:[%s13 + $0x40] sm:$0xff]
    %v847 = vld [vmem:[%s13 + $0x48] sm:$0xff]
    %v848 = vld [vmem:[%s13 + $0x50] sm:$0xff]
    %v849 = vld [vmem:[%s13 + $0x58] sm:$0xff]
    %v850 = vld [vmem:[%s13 + $0x60] sm:$0xff]
    %v851 = vld [vmem:[%s13 + $0x68] sm:$0xff]
    %v852 = vld [vmem:[%s13 + $0x70] sm:$0xff]
    %v853 = vld [vmem:[%s13 + $0x78] sm:$0xff]
    %v854 = vld [vmem:[%s14] sm:$0x1]
    %v856 = vlaneseq
    %v857 = vshrl.u32 %v856, 7
    %v858 = vsub.s32 0, %v857
    %v859 = vrot.slane %v854, %v858
    %861 = vmatprep.subr.mxu0 0.0
    %862 = vmatpush1.msra.mxu0 %v838
    %863 = vmatprep.subr.mxu0 0.0
    %864 = vmatpush1.msra.mxu0 %v839
    %865 = vmatprep.subr.mxu0 0.0
    %866 = vmatpush1.msra.mxu0 %v840
    %867 = vmatprep.subr.mxu0 0.0
    %868 = vmatpush1.msra.mxu0 %v841
    %869 = vmatprep.subr.mxu0 0.0
    %870 = vmatpush1.msra.mxu0 %v842
    %871 = vmatprep.subr.mxu0 0.0
    %872 = vmatpush1.msra.mxu0 %v843
    %873 = vmatprep.subr.mxu0 0.0
    %874 = vmatpush1.msra.mxu0 %v844
    %875 = vmatprep.subr.mxu0 0.0
    %876 = vmatpush1.msra.mxu0 %v845
    %877 = vmatprep.subr.mxu0 0.0
    %878 = vmatpush1.msra.mxu0 %v846
    %879 = vmatprep.subr.mxu0 0.0
    %880 = vmatpush1.msra.mxu0 %v847
    %881 = vmatprep.subr.mxu0 0.0
    %882 = vmatpush1.msra.mxu0 %v848
    %883 = vmatprep.subr.mxu0 0.0
    %884 = vmatpush1.msra.mxu0 %v849
    %885 = vmatprep.subr.mxu0 0.0
    %886 = vmatpush1.msra.mxu0 %v850
    %887 = vmatprep.subr.mxu0 0.0
    %888 = vmatpush1.msra.mxu0 %v851
    %889 = vmatprep.subr.mxu0 0.0
    %890 = vmatpush1.msra.mxu0 %v852
    %891 = vmatprep.subr.mxu0 0.0
    %892 = vmatpush1.msra.mxu0 %v853
    %893 = vmatprep.subr.mxu0 0.0
    %894 = vmatpush1.msra.mxu0 0.0
    %895 = vmatprep.subr.mxu0 0.0
    %896 = vmatpush1.msra.mxu0 0.0
    %897 = vmatprep.subr.mxu0 0.0
    %898 = vmatpush1.msra.mxu0 0.0
    %899 = vmatprep.subr.mxu0 0.0
    %900 = vmatpush1.msra.mxu0 0.0
    %901 = vmatprep.subr.mxu0 0.0
    %902 = vmatpush1.msra.mxu0 0.0
    %903 = vmatprep.subr.mxu0 0.0
    %904 = vmatpush1.msra.mxu0 0.0
    %905 = vmatprep.subr.mxu0 0.0
    %906 = vmatpush1.msra.mxu0 0.0
    %907 = vmatprep.subr.mxu0 0.0
    %908 = vmatpush1.msra.mxu0 0.0
    %909 = vmatprep.subr.mxu0 0.0
    %910 = vmatpush1.msra.mxu0 0.0
    %911 = vmatprep.subr.mxu0 0.0
    %912 = vmatpush1.msra.mxu0 0.0
    %913 = vmatprep.subr.mxu0 0.0
    %914 = vmatpush1.msra.mxu0 0.0
    %915 = vmatprep.subr.mxu0 0.0
    %916 = vmatpush1.msra.mxu0 0.0
    %917 = vmatprep.subr.mxu0 0.0
    %918 = vmatpush1.msra.mxu0 0.0
    %919 = vmatprep.subr.mxu0 0.0
    %920 = vmatpush1.msra.mxu0 0.0
    %921 = vmatprep.subr.mxu0 0.0
    %922 = vmatpush1.msra.mxu0 0.0
    %923 = vmatprep.subr.mxu0 0.0
    %924 = vmatpush1.msra.mxu0 0.0
    %925 = vmatprep.mubr.f32.mxu0 0.0
    %926 = vmatmul.mubr.f32.gmra.mrb[0].mxu0 %v836
    %v927 = vpop.f32.mrb[0].mxu0
    %v928 = vadd.f32 %v859, %v927
    %v929 = vpop.f32.mrb[0].mxu0
    %930 = vdwg.mxu0
    %v931 = vxor.u32 %v928, 2147483648
    %v932 = vmul.f32 %v931, 1.442695
    %v933 = vpow.pop %v932
    %v934 = vadd.f32 %v933, 1.0
    %v935 = vrcp.pop %v934
    %v936 = vmul.f32 1.0, %v935
    %v937 = vld [vmem:[%s15] sm:$0xff]
    %v938 = vld [vmem:[%s16] sm:$0x1]
    %v940 = vlaneseq
    %v941 = vshrl.u32 %v940, 7
    %v942 = vsub.s32 0, %v941
    %v943 = vrot.slane %v938, %v942
    %vm945 = vcmask 64512
    %v947 = vsel %vm945, %v936, 0
    %949 = vmatprep.subr.mxu0 0.0
    %950 = vmatpush1.msra.mxu0 %v937
    %951 = vmatprep.subr.mxu0 0.0
    %952 = vmatpush1.msra.mxu0 0.0
    %953 = vmatprep.subr.mxu0 0.0
    %954 = vmatpush1.msra.mxu0 0.0
    %955 = vmatprep.subr.mxu0 0.0
    %956 = vmatpush1.msra.mxu0 0.0
    %957 = vmatprep.subr.mxu0 0.0
    %958 = vmatpush1.msra.mxu0 0.0
    %959 = vmatprep.subr.mxu0 0.0
    %960 = vmatpush1.msra.mxu0 0.0
    %961 = vmatprep.subr.mxu0 0.0
    %962 = vmatpush1.msra.mxu0 0.0
    %963 = vmatprep.subr.mxu0 0.0
    %964 = vmatpush1.msra.mxu0 0.0
    %965 = vmatprep.subr.mxu0 0.0
    %966 = vmatpush1.msra.mxu0 0.0
    %967 = vmatprep.subr.mxu0 0.0
    %968 = vmatpush1.msra.mxu0 0.0
    %969 = vmatprep.subr.mxu0 0.0
    %970 = vmatpush1.msra.mxu0 0.0
    %971 = vmatprep.subr.mxu0 0.0
    %972 = vmatpush1.msra.mxu0 0.0
    %973 = vmatprep.subr.mxu0 0.0
    %974 = vmatpush1.msra.mxu0 0.0
    %975 = vmatprep.subr.mxu0 0.0
    %976 = vmatpush1.msra.mxu0 0.0
    %977 = vmatprep.subr.mxu0 0.0
    %978 = vmatpush1.msra.mxu0 0.0
    %979 = vmatprep.subr.mxu0 0.0
    %980 = vmatpush1.msra.mxu0 0.0
    %981 = vmatprep.subr.mxu0 0.0
    %982 = vmatpush1.msra.mxu0 0.0
    %983 = vmatprep.subr.mxu0 0.0
    %984 = vmatpush1.msra.mxu0 0.0
    %985 = vmatprep.subr.mxu0 0.0
    %986 = vmatpush1.msra.mxu0 0.0
    %987 = vmatprep.subr.mxu0 0.0
    %988 = vmatpush1.msra.mxu0 0.0
    %989 = vmatprep.subr.mxu0 0.0
    %990 = vmatpush1.msra.mxu0 0.0
    %991 = vmatprep.subr.mxu0 0.0
    %992 = vmatpush1.msra.mxu0 0.0
    %993 = vmatprep.subr.mxu0 0.0
    %994 = vmatpush1.msra.mxu0 0.0
    %995 = vmatprep.subr.mxu0 0.0
    %996 = vmatpush1.msra.mxu0 0.0
    %997 = vmatprep.subr.mxu0 0.0
    %998 = vmatpush1.msra.mxu0 0.0
    %999 = vmatprep.subr.mxu0 0.0
    %1000 = vmatpush1.msra.mxu0 0.0
    %1001 = vmatprep.subr.mxu0 0.0
    %1002 = vmatpush1.msra.mxu0 0.0
    %1003 = vmatprep.subr.mxu0 0.0
    %1004 = vmatpush1.msra.mxu0 0.0
    %1005 = vmatprep.subr.mxu0 0.0
    %1006 = vmatpush1.msra.mxu0 0.0
    %1007 = vmatprep.subr.mxu0 0.0
    %1008 = vmatpush1.msra.mxu0 0.0
    %1009 = vmatprep.subr.mxu0 0.0
    %1010 = vmatpush1.msra.mxu0 0.0
    %1011 = vmatprep.subr.mxu0 0.0
    %1012 = vmatpush1.msra.mxu0 0.0
    %1013 = vmatprep.mubr.f32.mxu0 0.0
    %1014 = vmatmul.mubr.f32.gmra.mrb[0].mxu0 %v947
    %v1015 = vpop.f32.mrb[0].mxu0
    %v1016 = vadd.f32 %v943, %v1015
    %v1017 = vpop.f32.mrb[0].mxu0
    %1018 = vdwg.mxu0
    %vm1019 = vcmask 130048
    %1020 = vst.msk [vmem:[#allocation2] sm:$0xff] %vm1019, %v1016
    // Predicated region
    $region70: #{predictor_forward.1} parent=1 // pred_check
      _
    $region71: #{predictor_forward.1} parent=1 // pred_check_branch
      %1022 = sbr.rel (0) target = $region73
    $region72: #{predictor_forward.1} parent=1 // pred_region
      _
    $region73: #{predictor_forward.1} parent=1 // pred_fallthru
      _
    // Predicated region
    $region74: #{predictor_forward.1} parent=1 // pred_check
      _
    $region75: #{predictor_forward.1} parent=1 // pred_check_branch
      %1024 = sbr.rel (0) target = $region77
    $region76: #{predictor_forward.1} parent=1 // pred_region
      %s1026 = ssub.s32 128, 128
      %1027 = vsyncadd [#allocation3], %s1026
      %s1029 = sshll.u32 [#allocation2], 4
      %s1030 = int_to_ptr.vmem [resolvable:$true] %s1029
      %1032 = dma.vmem_to_hbm [thread:$0]  %s1030, 128, %s18, [#allocation3]
    $region77: #{predictor_forward.1} parent=1 // pred_fallthru
      _
    // Predicated region
    $region78: #{predictor_forward.1} parent=1 // pred_check
      _
    $region79: #{predictor_forward.1} parent=1 // pred_check_branch
      %1034 = sbr.rel (0) target = $region81
    $region80: #{predictor_forward.1} parent=1 // pred_region
      _
    $region81: #{predictor_forward.1} parent=1 // pred_fallthru
      _
    // Predicated region
    $region82: #{predictor_forward.1} parent=1 // pred_check
      _
    $region83: #{predictor_forward.1} parent=1 // pred_check_branch
      %1036 = sbr.rel (0) target = $region85
    $region84: #{predictor_forward.1} parent=1 // pred_region
      %1037 = dma.done [#allocation3], 128
    $region85: #{predictor_forward.1} parent=1 // pred_fallthru
      _
    %1038 = vsyncpa [#allocation3], 1

</llo_original>
